<compile_context>
chip_gen: v7x
topology: tpu7x:2x2x1
jax: 0.10.0
libtpu: 0.0.40
codegen_flags: <defaults>
</compile_context>

<pallas_src>
import jax
import jax.numpy as jnp
from jax import lax
from jax.experimental import pallas as pl
from jax.experimental.pallas import tpu as pltpu


def _round_up(x, m):
    return ((x + m - 1) // m) * m


def _mlp_kernel(x_ref,
                w1_ref, b1_ref,
                w2_ref, b2_ref,
                w3_ref, b3_ref,
                w4_ref, b4_ref,
                w5_ref, b5_ref,
                w6_ref, b6_ref,
                o_ref):
    # Activations carried in bf16 between layers; f32 MXU accumulation;
    # bias/ReLU/sigmoid math in f32 (portable to v5e).
    h = x_ref[...].astype(jnp.bfloat16)                 # (tile_b, in_dim)

    def linear_relu(h_bf16, w_ref, b_ref):
        z = jnp.dot(h_bf16, w_ref[...],
                    preferred_element_type=jnp.float32) + b_ref[...]
        return jnp.maximum(z, 0.0).astype(jnp.bfloat16)

    h = linear_relu(h, w1_ref, b1_ref)                  # 14   -> 1024
    h = linear_relu(h, w2_ref, b2_ref)                  # 1024 -> 512
    h = linear_relu(h, w3_ref, b3_ref)                  # 512  -> 256
    h = linear_relu(h, w4_ref, b4_ref)                  # 256  -> 128
    h = linear_relu(h, w5_ref, b5_ref)                  # 128  -> 128 (cols 64..127 are zero)

    # Final 64->1 layer computed directly into lane-dense (1, tile_b) layout:
    # contract both operands' last dim (q @ k.T pattern). Padded w6 columns are
    # zero, so the extra 64 columns of h contribute nothing.
    z = lax.dot_general(w6_ref[...], h,
                        dimension_numbers=(((1,), (1,)), ((), ())),
                        preferred_element_type=jnp.float32)      # (1, tile_b)
    z = z + b6_ref[...]                                          # (1,1) broadcast

    # sigmoid(z) = 0.5 * (1 + tanh(z/2)) -> single EUP op, numerically robust.
    o_ref[...] = 0.5 * (1.0 + jnp.tanh(0.5 * z))


def _choose_tiling(batch, desired_tile=512):
    """Pick (tile_b, padded_batch).

    - tiny batches: one tile sized to the sublane-aligned batch (no 16x padding waste)
    - large batches: tiles capped at `desired_tile`, lane-aligned (128) because the
      tile is the lane dim of the output row, and at least 2 grid steps so v7x's
      two TensorCores both get work.
    """
    rounded = max(8, _round_up(batch, 8))
    if rounded <= desired_tile:
        return rounded, rounded
    num_tiles = max(2, -(-rounded // desired_tile))
    tile_b = _round_up(-(-rounded // num_tiles), 128)
    padded = tile_b * num_tiles
    return tile_b, padded


def overfitting_fcnn_forward(x, kparams, *, desired_tile=512):
    """x: [batch, input_dim] f32; kparams: kernel-layout params (pack_params_for_kernel)."""
    batch, in_dim = x.shape
    tile_b, padded = _choose_tiling(batch, desired_tile)
    if padded != batch:
        x = jnp.pad(x, ((0, padded - batch), (0, 0)))
    num_tiles = padded // tile_b

    x_spec = pl.BlockSpec((tile_b, in_dim), lambda i: (i, 0))
    # Full-array blocks + constant index_map -> params DMA'd once and resident in
    # VMEM across all grid steps; Buffered(1) single-buffers them (their block
    # never changes, so double-buffering only wastes VMEM).
    param_specs = [
        pl.BlockSpec(p.shape, lambda i: (0, 0), pipeline_mode=pl.Buffered(1))
        for p in kparams
    ]
    # Lane-dense output: one (1, tile_b) row per grid step of a (1, padded) array.
    out_spec = pl.BlockSpec((1, tile_b), lambda i: (0, i))

    out = pl.pallas_call(
        _mlp_kernel,
        out_shape=jax.ShapeDtypeStruct((1, padded), jnp.float32),
        grid=(num_tiles,),
        in_specs=[x_spec] + param_specs,
        out_specs=out_spec,
        compiler_params=pltpu.CompilerParams(
            dimension_semantics=("parallel",),   # v7x: shard batch tiles across 2 TCs
            vmem_limit_bytes=32 << 20,
        ),
    )(x, *kparams)

    return out[0, :batch].reshape(batch, 1)


def init_params(key, input_dim):
    """PyTorch-Linear-like init (U[-1/sqrt(fan_in), +1/sqrt(fan_in)]), f32, [in, out]."""
    dims = [input_dim, 1024, 512, 256, 128, 64, 1]
    params = []
    for i in range(6):
        fan_in, fan_out = dims[i], dims[i + 1]
        key, kw, kb = jax.random.split(key, 3)
        bound = 1.0 / jnp.sqrt(jnp.float32(fan_in))
        w = jax.random.uniform(kw, (fan_in, fan_out), jnp.float32, -bound, bound)
        b = jax.random.uniform(kb, (1, fan_out), jnp.float32, -bound, bound)
        params += [w, b]
    return params


def pack_params_for_kernel(params):
    """Kernel layout:
       w1..w4: bf16 [in, out]; b1..b4: f32 [1, out]
       layer 5 zero-padded 64 -> 128 out cols: w5 bf16 (128,128), b5 f32 (1,128)
       w6: zero-padded bf16 (1,128) row; b6: f32 (1,1)."""
    kparams = []
    for i in range(4):
        w, b = params[2 * i], params[2 * i + 1]
        kparams += [w.astype(jnp.bfloat16), b]
    w5, b5 = params[8], params[9]                                   # (128,64), (1,64)
    kparams += [jnp.pad(w5, ((0, 0), (0, 64))).astype(jnp.bfloat16),
                jnp.pad(b5, ((0, 0), (0, 64)))]
    w6, b6 = params[10], params[11]                                 # (64,1), (1,1)
    kparams += [jnp.pad(w6.reshape(1, -1), ((0, 0), (0, 64))).astype(jnp.bfloat16),
                b6]
    return kparams


def reference_forward(x, params):
    """Pure-JAX reference mirroring the kernel's bf16-weight / bf16-activation,
    f32-accumulate numerics (intentional bf16 trade-off vs. pure-f32 PyTorch)."""
    h = x.astype(jnp.bfloat16)
    for i in range(5):
        w, b = params[2 * i], params[2 * i + 1]
        z = jnp.dot(h, w.astype(jnp.bfloat16),
                    preferred_element_type=jnp.float32) + b
        h = jnp.maximum(z, 0.0).astype(jnp.bfloat16)
    w6, b6 = params[10], params[11]
    z = jnp.dot(h, w6.astype(jnp.bfloat16),
                preferred_element_type=jnp.float32) + b6
    return 0.5 * (1.0 + jnp.tanh(0.5 * z))


if __name__ == "__main__":
    key = jax.random.PRNGKey(0)
    key_x, key_p = jax.random.split(key)

    batch, input_dim = 8, 14                 # MA_20_14 -> 14 input features
    x = jax.random.normal(key_x, (batch, input_dim), jnp.float32)
    params = init_params(key_p, input_dim)
    kparams = pack_params_for_kernel(params)

    out = overfitting_fcnn_forward(x, kparams)
    out = jax.block_until_ready(out)

    ref = reference_forward(x, params)
    assert out.shape == (batch, 1), out.shape
    max_err = jnp.max(jnp.abs(out - ref))
    assert jnp.allclose(out, ref, atol=2e-3, rtol=2e-3), f"max abs err {max_err}"

    print("KERNEL_OK")
</pallas_src>

<mosaic_0001>
module attributes {stable_mosaic.version = 11 : i64} {
  func.func @_mlp_kernel(%arg0: i32, %arg1: memref<8x14xf32, #tpu.memory_space<vmem>>, %arg2: memref<14x1024xbf16, #tpu.memory_space<vmem>>, %arg3: memref<1x1024xf32, #tpu.memory_space<vmem>>, %arg4: memref<1024x512xbf16, #tpu.memory_space<vmem>>, %arg5: memref<1x512xf32, #tpu.memory_space<vmem>>, %arg6: memref<512x256xbf16, #tpu.memory_space<vmem>>, %arg7: memref<1x256xf32, #tpu.memory_space<vmem>>, %arg8: memref<256x128xbf16, #tpu.memory_space<vmem>>, %arg9: memref<1x128xf32, #tpu.memory_space<vmem>>, %arg10: memref<128x128xbf16, #tpu.memory_space<vmem>>, %arg11: memref<1x128xf32, #tpu.memory_space<vmem>>, %arg12: memref<1x128xbf16, #tpu.memory_space<vmem>>, %arg13: memref<1x1xf32, #tpu.memory_space<vmem>>, %arg14: memref<1x8xf32, #tpu.memory_space<vmem>>) attributes {dimension_semantics = [#tpu.dimension_semantics<parallel>], iteration_bounds = array<i64: 1>, scalar_prefetch = 0 : i64, scratch_operands = 0 : i64, tpu.core_type = #tpu.core_type<tc>, window_params = [{transform_indices = @transform_0, window_bounds = array<i64: 8, 14>}, {pipeline_mode = #tpu.pipeline_mode<synchronous>, transform_indices = @transform_1, window_bounds = array<i64: 14, 1024>}, {pipeline_mode = #tpu.pipeline_mode<synchronous>, transform_indices = @transform_2, window_bounds = array<i64: 1, 1024>}, {pipeline_mode = #tpu.pipeline_mode<synchronous>, transform_indices = @transform_3, window_bounds = array<i64: 1024, 512>}, {pipeline_mode = #tpu.pipeline_mode<synchronous>, transform_indices = @transform_4, window_bounds = array<i64: 1, 512>}, {pipeline_mode = #tpu.pipeline_mode<synchronous>, transform_indices = @transform_5, window_bounds = array<i64: 512, 256>}, {pipeline_mode = #tpu.pipeline_mode<synchronous>, transform_indices = @transform_6, window_bounds = array<i64: 1, 256>}, {pipeline_mode = #tpu.pipeline_mode<synchronous>, transform_indices = @transform_7, window_bounds = array<i64: 256, 128>}, {pipeline_mode = #tpu.pipeline_mode<synchronous>, transform_indices = @transform_8, window_bounds = array<i64: 1, 128>}, {pipeline_mode = #tpu.pipeline_mode<synchronous>, transform_indices = @transform_9, window_bounds = array<i64: 128, 128>}, {pipeline_mode = #tpu.pipeline_mode<synchronous>, transform_indices = @transform_10, window_bounds = array<i64: 1, 128>}, {pipeline_mode = #tpu.pipeline_mode<synchronous>, transform_indices = @transform_11, window_bounds = array<i64: 1, 128>}, {pipeline_mode = #tpu.pipeline_mode<synchronous>, transform_indices = @transform_12, window_bounds = array<i64: 1, 1>}, {transform_indices = @transform_13, window_bounds = array<i64: 1, 8>}]} {
    %c0 = arith.constant 0 : index
    %c0_0 = arith.constant 0 : index
    %0 = vector.load %arg1[%c0, %c0_0] : memref<8x14xf32, #tpu.memory_space<vmem>>, vector<8x14xf32>
    %1 = arith.truncf %0 : vector<8x14xf32> to vector<8x14xbf16>
    %c0_1 = arith.constant 0 : index
    %c0_2 = arith.constant 0 : index
    %2 = vector.load %arg2[%c0_1, %c0_2] : memref<14x1024xbf16, #tpu.memory_space<vmem>>, vector<14x1024xbf16>
    %cst = arith.constant dense<0.000000e+00> : vector<8x1024xf32>
    %3 = tpu.matmul %1, %2, %cst {dimension_numbers = #tpu.dot_dimension_numbers<[1], [0], [0], [1], [0, 0, 1, 1], [], []>} : vector<8x14xbf16>, vector<14x1024xbf16>, vector<8x1024xf32> -> vector<8x1024xf32>
    %c0_3 = arith.constant 0 : index
    %c0_4 = arith.constant 0 : index
    %4 = vector.load %arg3[%c0_3, %c0_4] : memref<1x1024xf32, #tpu.memory_space<vmem>>, vector<1x1024xf32>
    %5 = vector.broadcast %4 : vector<1x1024xf32> to vector<8x1024xf32>
    %6 = arith.addf %3, %5 : vector<8x1024xf32>
    %cst_5 = arith.constant 0.000000e+00 : f32
    %7 = vector.broadcast %cst_5 : f32 to vector<8x1024xf32>
    %8 = arith.maximumf %6, %7 : vector<8x1024xf32>
    %9 = arith.truncf %8 : vector<8x1024xf32> to vector<8x1024xbf16>
    %c0_6 = arith.constant 0 : index
    %c0_7 = arith.constant 0 : index
    %10 = vector.load %arg4[%c0_6, %c0_7] : memref<1024x512xbf16, #tpu.memory_space<vmem>>, vector<1024x512xbf16>
    %cst_8 = arith.constant dense<0.000000e+00> : vector<8x512xf32>
    %11 = tpu.matmul %9, %10, %cst_8 {dimension_numbers = #tpu.dot_dimension_numbers<[1], [0], [0], [1], [0, 0, 1, 1], [], []>} : vector<8x1024xbf16>, vector<1024x512xbf16>, vector<8x512xf32> -> vector<8x512xf32>
    %c0_9 = arith.constant 0 : index
    %c0_10 = arith.constant 0 : index
    %12 = vector.load %arg5[%c0_9, %c0_10] : memref<1x512xf32, #tpu.memory_space<vmem>>, vector<1x512xf32>
    %13 = vector.broadcast %12 : vector<1x512xf32> to vector<8x512xf32>
    %14 = arith.addf %11, %13 : vector<8x512xf32>
    %cst_11 = arith.constant 0.000000e+00 : f32
    %15 = vector.broadcast %cst_11 : f32 to vector<8x512xf32>
    %16 = arith.maximumf %14, %15 : vector<8x512xf32>
    %17 = arith.truncf %16 : vector<8x512xf32> to vector<8x512xbf16>
    %c0_12 = arith.constant 0 : index
    %c0_13 = arith.constant 0 : index
    %18 = vector.load %arg6[%c0_12, %c0_13] : memref<512x256xbf16, #tpu.memory_space<vmem>>, vector<512x256xbf16>
    %cst_14 = arith.constant dense<0.000000e+00> : vector<8x256xf32>
    %19 = tpu.matmul %17, %18, %cst_14 {dimension_numbers = #tpu.dot_dimension_numbers<[1], [0], [0], [1], [0, 0, 1, 1], [], []>} : vector<8x512xbf16>, vector<512x256xbf16>, vector<8x256xf32> -> vector<8x256xf32>
    %c0_15 = arith.constant 0 : index
    %c0_16 = arith.constant 0 : index
    %20 = vector.load %arg7[%c0_15, %c0_16] : memref<1x256xf32, #tpu.memory_space<vmem>>, vector<1x256xf32>
    %21 = vector.broadcast %20 : vector<1x256xf32> to vector<8x256xf32>
    %22 = arith.addf %19, %21 : vector<8x256xf32>
    %cst_17 = arith.constant 0.000000e+00 : f32
    %23 = vector.broadcast %cst_17 : f32 to vector<8x256xf32>
    %24 = arith.maximumf %22, %23 : vector<8x256xf32>
    %25 = arith.truncf %24 : vector<8x256xf32> to vector<8x256xbf16>
    %c0_18 = arith.constant 0 : index
    %c0_19 = arith.constant 0 : index
    %26 = vector.load %arg8[%c0_18, %c0_19] : memref<256x128xbf16, #tpu.memory_space<vmem>>, vector<256x128xbf16>
    %cst_20 = arith.constant dense<0.000000e+00> : vector<8x128xf32>
    %27 = tpu.matmul %25, %26, %cst_20 {dimension_numbers = #tpu.dot_dimension_numbers<[1], [0], [0], [1], [0, 0, 1, 1], [], []>} : vector<8x256xbf16>, vector<256x128xbf16>, vector<8x128xf32> -> vector<8x128xf32>
    %c0_21 = arith.constant 0 : index
    %c0_22 = arith.constant 0 : index
    %28 = vector.load %arg9[%c0_21, %c0_22] : memref<1x128xf32, #tpu.memory_space<vmem>>, vector<1x128xf32>
    %29 = vector.broadcast %28 : vector<1x128xf32> to vector<8x128xf32>
    %30 = arith.addf %27, %29 : vector<8x128xf32>
    %cst_23 = arith.constant 0.000000e+00 : f32
    %31 = vector.broadcast %cst_23 : f32 to vector<8x128xf32>
    %32 = arith.maximumf %30, %31 : vector<8x128xf32>
    %33 = arith.truncf %32 : vector<8x128xf32> to vector<8x128xbf16>
    %c0_24 = arith.constant 0 : index
    %c0_25 = arith.constant 0 : index
    %34 = vector.load %arg10[%c0_24, %c0_25] : memref<128x128xbf16, #tpu.memory_space<vmem>>, vector<128x128xbf16>
    %cst_26 = arith.constant dense<0.000000e+00> : vector<8x128xf32>
    %35 = tpu.matmul %33, %34, %cst_26 {dimension_numbers = #tpu.dot_dimension_numbers<[1], [0], [0], [1], [0, 0, 1, 1], [], []>} : vector<8x128xbf16>, vector<128x128xbf16>, vector<8x128xf32> -> vector<8x128xf32>
    %c0_27 = arith.constant 0 : index
    %c0_28 = arith.constant 0 : index
    %36 = vector.load %arg11[%c0_27, %c0_28] : memref<1x128xf32, #tpu.memory_space<vmem>>, vector<1x128xf32>
    %37 = vector.broadcast %36 : vector<1x128xf32> to vector<8x128xf32>
    %38 = arith.addf %35, %37 : vector<8x128xf32>
    %cst_29 = arith.constant 0.000000e+00 : f32
    %39 = vector.broadcast %cst_29 : f32 to vector<8x128xf32>
    %40 = arith.maximumf %38, %39 : vector<8x128xf32>
    %41 = arith.truncf %40 : vector<8x128xf32> to vector<8x128xbf16>
    %c0_30 = arith.constant 0 : index
    %c0_31 = arith.constant 0 : index
    %42 = vector.load %arg12[%c0_30, %c0_31] : memref<1x128xbf16, #tpu.memory_space<vmem>>, vector<1x128xbf16>
    %cst_32 = arith.constant dense<0.000000e+00> : vector<1x8xf32>
    %43 = tpu.matmul %42, %41, %cst_32 {dimension_numbers = #tpu.dot_dimension_numbers<[1], [1], [0], [0], [0, 0, 1, 0], [], []>} : vector<1x128xbf16>, vector<8x128xbf16>, vector<1x8xf32> -> vector<1x8xf32>
    %c0_33 = arith.constant 0 : index
    %c0_34 = arith.constant 0 : index
    %44 = vector.load %arg13[%c0_33, %c0_34] : memref<1x1xf32, #tpu.memory_space<vmem>>, vector<1x1xf32>
    %45 = vector.broadcast %44 : vector<1x1xf32> to vector<1x8xf32>
    %46 = arith.addf %43, %45 : vector<1x8xf32>
    %cst_35 = arith.constant 5.000000e-01 : f32
    %47 = vector.broadcast %cst_35 : f32 to vector<1x8xf32>
    %48 = arith.mulf %47, %46 : vector<1x8xf32>
    %49 = math.tanh %48 : vector<1x8xf32>
    %cst_36 = arith.constant 1.000000e+00 : f32
    %50 = vector.broadcast %cst_36 : f32 to vector<1x8xf32>
    %51 = arith.addf %50, %49 : vector<1x8xf32>
    %cst_37 = arith.constant 5.000000e-01 : f32
    %52 = vector.broadcast %cst_37 : f32 to vector<1x8xf32>
    %53 = arith.mulf %52, %51 : vector<1x8xf32>
    %c0_38 = arith.constant 0 : index
    %c0_39 = arith.constant 0 : index
    %54 = vector.load %arg14[%c0_38, %c0_39] : memref<1x8xf32, #tpu.memory_space<vmem>>, vector<1x8xf32>
    tpu.vector_store %arg14[%c0_38, %c0_39], %53 {strides = array<i32>} : memref<1x8xf32, #tpu.memory_space<vmem>>, vector<1x8xf32>,
    return
  }
  func.func @transform_0(%arg0: i32) -> (i32, i32) {
    %c0_i32 = arith.constant 0 : i32
    %c0_i32_0 = arith.constant 0 : i32
    return %arg0, %c0_i32 : i32, i32
  }
  func.func @transform_1(%arg0: i32) -> (i32, i32) {
    %c0_i32 = arith.constant 0 : i32
    %c0_i32_0 = arith.constant 0 : i32
    %c0_i32_1 = arith.constant 0 : i32
    return %c0_i32, %c0_i32_0 : i32, i32
  }
  func.func @transform_2(%arg0: i32) -> (i32, i32) {
    %c0_i32 = arith.constant 0 : i32
    %c0_i32_0 = arith.constant 0 : i32
    %c0_i32_1 = arith.constant 0 : i32
    return %c0_i32, %c0_i32_0 : i32, i32
  }
  func.func @transform_3(%arg0: i32) -> (i32, i32) {
    %c0_i32 = arith.constant 0 : i32
    %c0_i32_0 = arith.constant 0 : i32
    %c0_i32_1 = arith.constant 0 : i32
    return %c0_i32, %c0_i32_0 : i32, i32
  }
  func.func @transform_4(%arg0: i32) -> (i32, i32) {
    %c0_i32 = arith.constant 0 : i32
    %c0_i32_0 = arith.constant 0 : i32
    %c0_i32_1 = arith.constant 0 : i32
    return %c0_i32, %c0_i32_0 : i32, i32
  }
  func.func @transform_5(%arg0: i32) -> (i32, i32) {
    %c0_i32 = arith.constant 0 : i32
    %c0_i32_0 = arith.constant 0 : i32
    %c0_i32_1 = arith.constant 0 : i32
    return %c0_i32, %c0_i32_0 : i32, i32
  }
  func.func @transform_6(%arg0: i32) -> (i32, i32) {
    %c0_i32 = arith.constant 0 : i32
    %c0_i32_0 = arith.constant 0 : i32
    %c0_i32_1 = arith.constant 0 : i32
    return %c0_i32, %c0_i32_0 : i32, i32
  }
  func.func @transform_7(%arg0: i32) -> (i32, i32) {
    %c0_i32 = arith.constant 0 : i32
    %c0_i32_0 = arith.constant 0 : i32
    %c0_i32_1 = arith.constant 0 : i32
    return %c0_i32, %c0_i32_0 : i32, i32
  }
  func.func @transform_8(%arg0: i32) -> (i32, i32) {
    %c0_i32 = arith.constant 0 : i32
    %c0_i32_0 = arith.constant 0 : i32
    %c0_i32_1 = arith.constant 0 : i32
    return %c0_i32, %c0_i32_0 : i32, i32
  }
  func.func @transform_9(%arg0: i32) -> (i32, i32) {
    %c0_i32 = arith.constant 0 : i32
    %c0_i32_0 = arith.constant 0 : i32
    %c0_i32_1 = arith.constant 0 : i32
    return %c0_i32, %c0_i32_0 : i32, i32
  }
  func.func @transform_10(%arg0: i32) -> (i32, i32) {
    %c0_i32 = arith.constant 0 : i32
    %c0_i32_0 = arith.constant 0 : i32
    %c0_i32_1 = arith.constant 0 : i32
    return %c0_i32, %c0_i32_0 : i32, i32
  }
  func.func @transform_11(%arg0: i32) -> (i32, i32) {
    %c0_i32 = arith.constant 0 : i32
    %c0_i32_0 = arith.constant 0 : i32
    %c0_i32_1 = arith.constant 0 : i32
    return %c0_i32, %c0_i32_0 : i32, i32
  }
  func.func @transform_12(%arg0: i32) -> (i32, i32) {
    %c0_i32 = arith.constant 0 : i32
    %c0_i32_0 = arith.constant 0 : i32
    %c0_i32_1 = arith.constant 0 : i32
    return %c0_i32, %c0_i32_0 : i32, i32
  }
  func.func @transform_13(%arg0: i32) -> (i32, i32) {
    %c0_i32 = arith.constant 0 : i32
    %c0_i32_0 = arith.constant 0 : i32
    return %c0_i32, %arg0 : i32, i32
  }
}

</mosaic_0001>

<llo_original>
// kernel: tpu_custom_call.1
$region0: #{tpu_custom_call.1}
  #allocation0 [shape = 'u32[]', space=smem, size = 0x4, offset = 0x4, fixed_abs, tag = 'smem constant byte address 0x4 - core index']
  #allocation1 [shape = 'u32[144,128]{1,0:T(1,128)}', space=vmem, size = 0x12000, scoped, tag = 'internal scratch']
  #allocation2 [shape = 'f32[1,1]{1,0:T(1,128)S(1)}', space=vmem, size = 0x200, scoped, tag = 'scoped memory for tpu_custom_call.1']
  %s0 = inlined_call_operand.hbm [shape: f32[8,14], index: 0, kind: input, shape index: {}]
  %s1 = inlined_call_operand.hbm [shape: bf16[14,1024], index: 1, kind: input, shape index: {}]
  %s2 = inlined_call_operand.vmem [shape: f32[1,1024], index: 2, kind: input, shape index: {}]
  %s3 = inlined_call_operand.hbm [shape: bf16[1024,512], index: 3, kind: input, shape index: {}]
  %s4 = inlined_call_operand.vmem [shape: f32[1,512], index: 4, kind: input, shape index: {}]
  %s5 = inlined_call_operand.hbm [shape: bf16[512,256], index: 5, kind: input, shape index: {}]
  %s6 = inlined_call_operand.vmem [shape: f32[1,256], index: 6, kind: input, shape index: {}]
  %s7 = inlined_call_operand.hbm [shape: bf16[256,128], index: 7, kind: input, shape index: {}]
  %s8 = inlined_call_operand.vmem [shape: f32[1,128], index: 8, kind: input, shape index: {}]
  %s9 = inlined_call_operand.hbm [shape: bf16[128,128], index: 9, kind: input, shape index: {}]
  %s10 = inlined_call_operand.vmem [shape: f32[1,128], index: 10, kind: input, shape index: {}]
  %s11 = inlined_call_operand.vmem [shape: bf16[1,128], index: 11, kind: input, shape index: {}]
  %s12 = inlined_call_operand.<no memory space> [shape: f32[1,1], index: 12, kind: input, shape index: {}]
  %s13 = inlined_call_operand.hbm [shape: f32[1,8], index: 13, kind: output, shape index: {}]
  %s14 = sld [smem:[#allocation0]]
  $region86: #{tpu_custom_call.1} parent=0
    _
  %s16 = ssub.s32 1, %s14
  %s17 = scalar_select 0, %s16, %s14
  %v18 = vstv %s12
  %19 = vst [vmem:[#allocation2] sm:$0x1] %v18
  $region1: #{tpu_custom_call.1} parent=0
    #allocation3 [shape = 'u8[4096]{0}', space=vmem, size = 0x1000, scoped, tag = 'input window, operand 0, single buffered']
    #allocation4 [shape = 's32[1]{0}', space=sflag, size = 0x4, scoped, tag = 'scoped memory for tpu_custom_call.1']
    #allocation5 [shape = 's32[1]{0}', space=sflag, size = 0x4, scoped, tag = 'scoped memory for tpu_custom_call.1']
    #allocation6 [shape = 'u8[32768]{0}', space=vmem, size = 0x8000, scoped, tag = 'input window, operand 1, single buffered']
    #allocation7 [shape = 's32[1]{0}', space=sflag, size = 0x4, scoped, tag = 'scoped memory for tpu_custom_call.1']
    #allocation8 [shape = 'u8[1048576]{0}', space=vmem, size = 0x100000, scoped, tag = 'input window, operand 3, single buffered']
    #allocation9 [shape = 'u8[262144]{0}', space=vmem, size = 0x40000, scoped, tag = 'input window, operand 5, single buffered']
    #allocation10 [shape = 's32[1]{0}', space=sflag, size = 0x4, scoped, tag = 'scoped memory for tpu_custom_call.1']
    #allocation11 [shape = 'u8[65536]{0}', space=vmem, size = 0x10000, scoped, tag = 'input window, operand 7, single buffered']
    #allocation12 [shape = 'u8[32768]{0}', space=vmem, size = 0x8000, scoped, tag = 'input window, operand 9, single buffered']
    #allocation13 [shape = 's32[1]{0}', space=sflag, size = 0x4, scoped, tag = 'scoped memory for tpu_custom_call.1']
    #allocation14 [shape = 'u8[512]{0}', space=vmem, size = 0x400, scoped, tag = 'output window, operand 0, single buffered']
    %20 = vsyncpa [#allocation4], 0
    %21 = vsyncpa [#allocation7], 0
    %22 = vsyncpa [#allocation10], 0
    %23 = vsyncpa [#allocation13], 0
    %24 = vsyncpa [#allocation5], 0
    // Predicated region
    $region2: #{tpu_custom_call.1} parent=1 // pred_check
      _
    $region3: #{tpu_custom_call.1} parent=1 // pred_check_branch
      %26 = sbr.rel (0) target = $region5
    $region4: #{tpu_custom_call.1} parent=1 // pred_region
      %s28 = ssub.s32 128, 128
      %29 = vsyncadd [#allocation4], %s28
      %s31 = sshll.u32 [#allocation3], 4
      %s32 = int_to_ptr.vmem [resolvable:$true] %s31
      %34 = dma.hbm_to_vmem [thread:$0]  %s0, 128, %s32, [#allocation4]
    $region5: #{tpu_custom_call.1} parent=1 // pred_fallthru
      _
    // Predicated region
    $region6: #{tpu_custom_call.1} parent=1 // pred_check
      _
    $region7: #{tpu_custom_call.1} parent=1 // pred_check_branch
      %36 = sbr.rel (0) target = $region9
    $region8: #{tpu_custom_call.1} parent=1 // pred_region
      %s38 = ssub.s32 1024, 1024
      %39 = vsyncadd [#allocation7], %s38
      %s40 = sshll.u32 [#allocation6], 4
      %s41 = int_to_ptr.vmem [resolvable:$true] %s40
      %46 = dma.hbm_to_vmem [thread:$0]  %s1, 1024, %s41, [#allocation7], 512, 512, 32
    $region9: #{tpu_custom_call.1} parent=1 // pred_fallthru
      _
    // Predicated region
    $region10: #{tpu_custom_call.1} parent=1 // pred_check
      _
    $region11: #{tpu_custom_call.1} parent=1 // pred_check_branch
      %48 = sbr.rel (0) target = $region13
    $region12: #{tpu_custom_call.1} parent=1 // pred_region
      _
    $region13: #{tpu_custom_call.1} parent=1 // pred_fallthru
      _
    // Predicated region
    $region14: #{tpu_custom_call.1} parent=1 // pred_check
      _
    $region15: #{tpu_custom_call.1} parent=1 // pred_check_branch
      %50 = sbr.rel (0) target = $region17
    $region16: #{tpu_custom_call.1} parent=1 // pred_region
      %s52 = ssub.s32 32768, 32768
      %53 = vsyncadd [#allocation7], %s52
      %s54 = sshll.u32 [#allocation8], 4
      %s55 = int_to_ptr.vmem [resolvable:$true] %s54
      %60 = dma.hbm_to_vmem [thread:$0]  %s3, 32768, %s55, [#allocation7], 256, 256, 16
    $region17: #{tpu_custom_call.1} parent=1 // pred_fallthru
      _
    // Predicated region
    $region18: #{tpu_custom_call.1} parent=1 // pred_check
      _
    $region19: #{tpu_custom_call.1} parent=1 // pred_check_branch
      %62 = sbr.rel (0) target = $region21
    $region20: #{tpu_custom_call.1} parent=1 // pred_region
      _
    $region21: #{tpu_custom_call.1} parent=1 // pred_fallthru
      _
    // Predicated region
    $region22: #{tpu_custom_call.1} parent=1 // pred_check
      _
    $region23: #{tpu_custom_call.1} parent=1 // pred_check_branch
      %64 = sbr.rel (0) target = $region25
    $region24: #{tpu_custom_call.1} parent=1 // pred_region
      %s66 = ssub.s32 8192, 8192
      %67 = vsyncadd [#allocation10], %s66
      %s68 = sshll.u32 [#allocation9], 4
      %s69 = int_to_ptr.vmem [resolvable:$true] %s68
      %74 = dma.hbm_to_vmem [thread:$0]  %s5, 8192, %s69, [#allocation10], 128, 128, 8
    $region25: #{tpu_custom_call.1} parent=1 // pred_fallthru
      _
    // Predicated region
    $region26: #{tpu_custom_call.1} parent=1 // pred_check
      _
    $region27: #{tpu_custom_call.1} parent=1 // pred_check_branch
      %76 = sbr.rel (0) target = $region29
    $region28: #{tpu_custom_call.1} parent=1 // pred_region
      _
    $region29: #{tpu_custom_call.1} parent=1 // pred_fallthru
      _
    // Predicated region
    $region30: #{tpu_custom_call.1} parent=1 // pred_check
      _
    $region31: #{tpu_custom_call.1} parent=1 // pred_check_branch
      %78 = sbr.rel (0) target = $region33
    $region32: #{tpu_custom_call.1} parent=1 // pred_region
      %s80 = ssub.s32 2048, 2048
      %81 = vsyncadd [#allocation10], %s80
      %s82 = sshll.u32 [#allocation11], 4
      %s83 = int_to_ptr.vmem [resolvable:$true] %s82
      %88 = dma.hbm_to_vmem [thread:$0]  %s7, 2048, %s83, [#allocation10], 64, 64, 4
    $region33: #{tpu_custom_call.1} parent=1 // pred_fallthru
      _
    // Predicated region
    $region34: #{tpu_custom_call.1} parent=1 // pred_check
      _
    $region35: #{tpu_custom_call.1} parent=1 // pred_check_branch
      %90 = sbr.rel (0) target = $region37
    $region36: #{tpu_custom_call.1} parent=1 // pred_region
      _
    $region37: #{tpu_custom_call.1} parent=1 // pred_fallthru
      _
    // Predicated region
    $region38: #{tpu_custom_call.1} parent=1 // pred_check
      _
    $region39: #{tpu_custom_call.1} parent=1 // pred_check_branch
      %92 = sbr.rel (0) target = $region41
    $region40: #{tpu_custom_call.1} parent=1 // pred_region
      %s94 = ssub.s32 1024, 1024
      %95 = vsyncadd [#allocation13], %s94
      %s96 = sshll.u32 [#allocation12], 4
      %s97 = int_to_ptr.vmem [resolvable:$true] %s96
      %102 = dma.hbm_to_vmem [thread:$0]  %s9, 1024, %s97, [#allocation13], 64, 64, 4
    $region41: #{tpu_custom_call.1} parent=1 // pred_fallthru
      _
    // Predicated region
    $region42: #{tpu_custom_call.1} parent=1 // pred_check
      _
    $region43: #{tpu_custom_call.1} parent=1 // pred_check_branch
      %104 = sbr.rel (0) target = $region45
    $region44: #{tpu_custom_call.1} parent=1 // pred_region
      _
    $region45: #{tpu_custom_call.1} parent=1 // pred_fallthru
      _
    // Predicated region
    $region46: #{tpu_custom_call.1} parent=1 // pred_check
      _
    $region47: #{tpu_custom_call.1} parent=1 // pred_check_branch
      %106 = sbr.rel (0) target = $region49
    $region48: #{tpu_custom_call.1} parent=1 // pred_region
      _
    $region49: #{tpu_custom_call.1} parent=1 // pred_fallthru
      _
    // Predicated region
    $region50: #{tpu_custom_call.1} parent=1 // pred_check
      _
    $region51: #{tpu_custom_call.1} parent=1 // pred_check_branch
      %108 = sbr.rel (0) target = $region53
    $region52: #{tpu_custom_call.1} parent=1 // pred_region
      _
    $region53: #{tpu_custom_call.1} parent=1 // pred_fallthru
      _
    // Predicated region
    $region54: #{tpu_custom_call.1} parent=1 // pred_check
      _
    $region55: #{tpu_custom_call.1} parent=1 // pred_check_branch
      %110 = sbr.rel (0) target = $region57
    $region56: #{tpu_custom_call.1} parent=1 // pred_region
      %111 = dma.done [#allocation4], 128
    $region57: #{tpu_custom_call.1} parent=1 // pred_fallthru
      _
    // Predicated region
    $region58: #{tpu_custom_call.1} parent=1 // pred_check
      _
    $region59: #{tpu_custom_call.1} parent=1 // pred_check_branch
      %113 = sbr.rel (0) target = $region61
    $region60: #{tpu_custom_call.1} parent=1 // pred_region
      %114 = dma.done [#allocation7], 1024
    $region61: #{tpu_custom_call.1} parent=1 // pred_fallthru
      _
    // Predicated region
    $region62: #{tpu_custom_call.1} parent=1 // pred_check
      _
    $region63: #{tpu_custom_call.1} parent=1 // pred_check_branch
      %116 = sbr.rel (0) target = $region65
    $region64: #{tpu_custom_call.1} parent=1 // pred_region
      %117 = dma.done [#allocation7], 32768
    $region65: #{tpu_custom_call.1} parent=1 // pred_fallthru
      _
    // Predicated region
    $region66: #{tpu_custom_call.1} parent=1 // pred_check
      _
    $region67: #{tpu_custom_call.1} parent=1 // pred_check_branch
      %119 = sbr.rel (0) target = $region69
    $region68: #{tpu_custom_call.1} parent=1 // pred_region
      %120 = dma.done [#allocation10], 8192
    $region69: #{tpu_custom_call.1} parent=1 // pred_fallthru
      _
    // Predicated region
    $region70: #{tpu_custom_call.1} parent=1 // pred_check
      _
    $region71: #{tpu_custom_call.1} parent=1 // pred_check_branch
      %122 = sbr.rel (0) target = $region73
    $region72: #{tpu_custom_call.1} parent=1 // pred_region
      %123 = dma.done [#allocation10], 2048
    $region73: #{tpu_custom_call.1} parent=1 // pred_fallthru
      _
    // Predicated region
    $region74: #{tpu_custom_call.1} parent=1 // pred_check
      _
    $region75: #{tpu_custom_call.1} parent=1 // pred_check_branch
      %125 = sbr.rel (0) target = $region77
    $region76: #{tpu_custom_call.1} parent=1 // pred_region
      %126 = dma.done [#allocation13], 1024
    $region77: #{tpu_custom_call.1} parent=1 // pred_fallthru
      _
    %v128 = vld [vmem:[#allocation3] sm:$0xff]
    %v129 = vpack.c.bf16 %v128, %v128
    %v130 = vld [vmem:[#allocation6] sm:$0xff]
    %v131 = vld [vmem:[#allocation6 + $0x8] sm:$0xff]
    %v132 = vld [vmem:[#allocation6 + $0x10] sm:$0xff]
    %v133 = vld [vmem:[#allocation6 + $0x18] sm:$0xff]
    %v134 = vld [vmem:[#allocation6 + $0x20] sm:$0x77]
    %v135 = vld [vmem:[#allocation6 + $0x28] sm:$0x77]
    %v136 = vld [vmem:[#allocation6 + $0x30] sm:$0x77]
    %v137 = vld [vmem:[#allocation6 + $0x38] sm:$0x77]
    %v138 = vld [vmem:[%s2] sm:$0xff]
    %v140 = vlaneseq
    %v141 = vshrl.u32 %v140, 7
    %v142 = vsub.s32 0, %v141
    %v143 = vrot.slane %v138, %v142
    %v144 = vlaneseq
    %v145 = vshrl.u32 %v144, 7
    %v146 = vsub.s32 1, %v145
    %v147 = vrot.slane %v138, %v146
    %v148 = vlaneseq
    %v149 = vshrl.u32 %v148, 7
    %v150 = vsub.s32 2, %v149
    %v151 = vrot.slane %v138, %v150
    %v152 = vlaneseq
    %v153 = vshrl.u32 %v152, 7
    %v154 = vsub.s32 3, %v153
    %v155 = vrot.slane %v138, %v154
    %v156 = vlaneseq
    %v157 = vshrl.u32 %v156, 7
    %v158 = vsub.s32 4, %v157
    %v159 = vrot.slane %v138, %v158
    %v160 = vlaneseq
    %v161 = vshrl.u32 %v160, 7
    %v162 = vsub.s32 5, %v161
    %v163 = vrot.slane %v138, %v162
    %v164 = vlaneseq
    %v165 = vshrl.u32 %v164, 7
    %v166 = vsub.s32 6, %v165
    %v167 = vrot.slane %v138, %v166
    %v168 = vlaneseq
    %v169 = vshrl.u32 %v168, 7
    %v170 = vsub.s32 7, %v169
    %v171 = vrot.slane %v138, %v170
    %v188 = vunpack.c.l.b16 %v130
    %v189 = vunpack.c.h.b16 %v130
    %v190 = vunpack.c.l.b16 %v131
    %v191 = vunpack.c.h.b16 %v131
    %v192 = vunpack.c.l.b16 %v132
    %v193 = vunpack.c.h.b16 %v132
    %v194 = vunpack.c.l.b16 %v133
    %v195 = vunpack.c.h.b16 %v133
    %v196 = vunpack.c.l.b16 %v134
    %v197 = vunpack.c.h.b16 %v134
    %v198 = vunpack.c.l.b16 %v135
    %v199 = vunpack.c.h.b16 %v135
    %v200 = vunpack.c.l.b16 %v136
    %v201 = vunpack.c.h.b16 %v136
    %v202 = vunpack.c.l.b16 %v137
    %v203 = vunpack.c.h.b16 %v137
    %v204 = vpack.c.b16 %v196, %v188
    %v205 = vpack.c.b16 %v197, %v189
    %v206 = vpack.c.b16 %v198, %v190
    %v207 = vpack.c.b16 %v199, %v191
    %v208 = vpack.c.b16 %v200, %v192
    %v209 = vpack.c.b16 %v201, %v193
    %v210 = vpack.c.b16 %v202, %v194
    %v211 = vpack.c.b16 %v203, %v195
    %vm212 = vcmask 113664
    %v214 = vsel %vm212, %v129, 0
    %vm216 = vcmask 1046528
    %v218 = vsel %vm216, %v204, 0
    %v221 = vsel %vm216, %v205, 0
    %v224 = vsel %vm216, %v206, 0
    %v227 = vsel %vm216, %v207, 0
    %v230 = vsel %vm216, %v208, 0
    %v233 = vsel %vm216, %v209, 0
    %v236 = vsel %vm216, %v210, 0
    %v239 = vsel %vm216, %v211, 0
    %241 = vmatprep.subr.bf16.mxu0 %v221
    %242 = vmatpush1.bf16.msra.mxu0 %v218
    %243 = vmatprep.subr.bf16.mxu0 0
    %244 = vmatpush1.bf16.msra.mxu0 0
    %245 = vmatprep.subr.bf16.mxu0 0
    %246 = vmatpush1.bf16.msra.mxu0 0
    %247 = vmatprep.subr.bf16.mxu0 0
    %248 = vmatpush1.bf16.msra.mxu0 0
    %249 = vmatprep.subr.bf16.mxu0 0
    %250 = vmatpush1.bf16.msra.mxu0 0
    %251 = vmatprep.subr.bf16.mxu0 0
    %252 = vmatpush1.bf16.msra.mxu0 0
    %253 = vmatprep.subr.bf16.mxu0 0
    %254 = vmatpush1.bf16.msra.mxu0 0
    %255 = vmatprep.subr.bf16.mxu0 0
    %256 = vmatpush1.bf16.msra.mxu0 0
    %257 = vmatprep.subr.bf16.mxu0 0
    %258 = vmatpush1.bf16.msra.mxu0 0
    %259 = vmatprep.subr.bf16.mxu0 0
    %260 = vmatpush1.bf16.msra.mxu0 0
    %261 = vmatprep.subr.bf16.mxu0 0
    %262 = vmatpush1.bf16.msra.mxu0 0
    %263 = vmatprep.subr.bf16.mxu0 0
    %264 = vmatpush1.bf16.msra.mxu0 0
    %265 = vmatprep.subr.bf16.mxu0 0
    %266 = vmatpush1.bf16.msra.mxu0 0
    %267 = vmatprep.subr.bf16.mxu0 0
    %268 = vmatpush1.bf16.msra.mxu0 0
    %269 = vmatprep.subr.bf16.mxu0 0
    %270 = vmatpush1.bf16.msra.mxu0 0
    %271 = vmatprep.subr.bf16.mxu0 0
    %272 = vmatpush1.bf16.msra.mxu0 0
    %273 = vmatprep.mubr.bf16.mxu0 0
    %274 = vmatmul.mubr.bf16.gmra.mrb[0].mxu0 %v214
    %v275 = vpop.f32.mrb[0].mxu0
    %v276 = vadd.f32 %v143, %v275
    %v277 = vpop.f32.mrb[0].mxu0
    %v278 = vadd.f32 %v147, %v277
    %v279 = vpop.f32.mrb[0].mxu0
    %v280 = vpop.f32.mrb[0].mxu0
    %281 = vdwg.mxu0
    %282 = vmatprep.subr.bf16.mxu0 %v227
    %283 = vmatpush1.bf16.msra.mxu0 %v224
    %284 = vmatprep.subr.bf16.mxu0 0
    %285 = vmatpush1.bf16.msra.mxu0 0
    %286 = vmatprep.subr.bf16.mxu0 0
    %287 = vmatpush1.bf16.msra.mxu0 0
    %288 = vmatprep.subr.bf16.mxu0 0
    %289 = vmatpush1.bf16.msra.mxu0 0
    %290 = vmatprep.subr.bf16.mxu0 0
    %291 = vmatpush1.bf16.msra.mxu0 0
    %292 = vmatprep.subr.bf16.mxu0 0
    %293 = vmatpush1.bf16.msra.mxu0 0
    %294 = vmatprep.subr.bf16.mxu0 0
    %295 = vmatpush1.bf16.msra.mxu0 0
    %296 = vmatprep.subr.bf16.mxu0 0
    %297 = vmatpush1.bf16.msra.mxu0 0
    %298 = vmatprep.subr.bf16.mxu0 0
    %299 = vmatpush1.bf16.msra.mxu0 0
    %300 = vmatprep.subr.bf16.mxu0 0
    %301 = vmatpush1.bf16.msra.mxu0 0
    %302 = vmatprep.subr.bf16.mxu0 0
    %303 = vmatpush1.bf16.msra.mxu0 0
    %304 = vmatprep.subr.bf16.mxu0 0
    %305 = vmatpush1.bf16.msra.mxu0 0
    %306 = vmatprep.subr.bf16.mxu0 0
    %307 = vmatpush1.bf16.msra.mxu0 0
    %308 = vmatprep.subr.bf16.mxu0 0
    %309 = vmatpush1.bf16.msra.mxu0 0
    %310 = vmatprep.subr.bf16.mxu0 0
    %311 = vmatpush1.bf16.msra.mxu0 0
    %312 = vmatprep.subr.bf16.mxu0 0
    %313 = vmatpush1.bf16.msra.mxu0 0
    %314 = vmatprep.mubr.bf16.mxu0 0
    %315 = vmatmul.mubr.bf16.gmra.mrb[0].mxu0 %v214
    %v316 = vpop.f32.mrb[0].mxu0
    %v317 = vadd.f32 %v151, %v316
    %v318 = vpop.f32.mrb[0].mxu0
    %v319 = vadd.f32 %v155, %v318
    %v320 = vpop.f32.mrb[0].mxu0
    %v321 = vpop.f32.mrb[0].mxu0
    %322 = vdwg.mxu0
    %323 = vmatprep.subr.bf16.mxu0 %v233
    %324 = vmatpush1.bf16.msra.mxu0 %v230
    %325 = vmatprep.subr.bf16.mxu0 0
    %326 = vmatpush1.bf16.msra.mxu0 0
    %327 = vmatprep.subr.bf16.mxu0 0
    %328 = vmatpush1.bf16.msra.mxu0 0
    %329 = vmatprep.subr.bf16.mxu0 0
    %330 = vmatpush1.bf16.msra.mxu0 0
    %331 = vmatprep.subr.bf16.mxu0 0
    %332 = vmatpush1.bf16.msra.mxu0 0
    %333 = vmatprep.subr.bf16.mxu0 0
    %334 = vmatpush1.bf16.msra.mxu0 0
    %335 = vmatprep.subr.bf16.mxu0 0
    %336 = vmatpush1.bf16.msra.mxu0 0
    %337 = vmatprep.subr.bf16.mxu0 0
    %338 = vmatpush1.bf16.msra.mxu0 0
    %339 = vmatprep.subr.bf16.mxu0 0
    %340 = vmatpush1.bf16.msra.mxu0 0
    %341 = vmatprep.subr.bf16.mxu0 0
    %342 = vmatpush1.bf16.msra.mxu0 0
    %343 = vmatprep.subr.bf16.mxu0 0
    %344 = vmatpush1.bf16.msra.mxu0 0
    %345 = vmatprep.subr.bf16.mxu0 0
    %346 = vmatpush1.bf16.msra.mxu0 0
    %347 = vmatprep.subr.bf16.mxu0 0
    %348 = vmatpush1.bf16.msra.mxu0 0
    %349 = vmatprep.subr.bf16.mxu0 0
    %350 = vmatpush1.bf16.msra.mxu0 0
    %351 = vmatprep.subr.bf16.mxu0 0
    %352 = vmatpush1.bf16.msra.mxu0 0
    %353 = vmatprep.subr.bf16.mxu0 0
    %354 = vmatpush1.bf16.msra.mxu0 0
    %355 = vmatprep.mubr.bf16.mxu0 0
    %356 = vmatmul.mubr.bf16.gmra.mrb[0].mxu0 %v214
    %v357 = vpop.f32.mrb[0].mxu0
    %v358 = vadd.f32 %v159, %v357
    %v359 = vpop.f32.mrb[0].mxu0
    %v360 = vadd.f32 %v163, %v359
    %v361 = vpop.f32.mrb[0].mxu0
    %v362 = vpop.f32.mrb[0].mxu0
    %363 = vdwg.mxu0
    %364 = vmatprep.subr.bf16.mxu0 %v239
    %365 = vmatpush1.bf16.msra.mxu0 %v236
    %366 = vmatprep.subr.bf16.mxu0 0
    %367 = vmatpush1.bf16.msra.mxu0 0
    %368 = vmatprep.subr.bf16.mxu0 0
    %369 = vmatpush1.bf16.msra.mxu0 0
    %370 = vmatprep.subr.bf16.mxu0 0
    %371 = vmatpush1.bf16.msra.mxu0 0
    %372 = vmatprep.subr.bf16.mxu0 0
    %373 = vmatpush1.bf16.msra.mxu0 0
    %374 = vmatprep.subr.bf16.mxu0 0
    %375 = vmatpush1.bf16.msra.mxu0 0
    %376 = vmatprep.subr.bf16.mxu0 0
    %377 = vmatpush1.bf16.msra.mxu0 0
    %378 = vmatprep.subr.bf16.mxu0 0
    %379 = vmatpush1.bf16.msra.mxu0 0
    %380 = vmatprep.subr.bf16.mxu0 0
    %381 = vmatpush1.bf16.msra.mxu0 0
    %382 = vmatprep.subr.bf16.mxu0 0
    %383 = vmatpush1.bf16.msra.mxu0 0
    %384 = vmatprep.subr.bf16.mxu0 0
    %385 = vmatpush1.bf16.msra.mxu0 0
    %386 = vmatprep.subr.bf16.mxu0 0
    %387 = vmatpush1.bf16.msra.mxu0 0
    %388 = vmatprep.subr.bf16.mxu0 0
    %389 = vmatpush1.bf16.msra.mxu0 0
    %390 = vmatprep.subr.bf16.mxu0 0
    %391 = vmatpush1.bf16.msra.mxu0 0
    %392 = vmatprep.subr.bf16.mxu0 0
    %393 = vmatpush1.bf16.msra.mxu0 0
    %394 = vmatprep.subr.bf16.mxu0 0
    %395 = vmatpush1.bf16.msra.mxu0 0
    %396 = vmatprep.mubr.bf16.mxu0 0
    %397 = vmatmul.mubr.bf16.gmra.mrb[0].mxu0 %v214
    %v398 = vpop.f32.mrb[0].mxu0
    %v399 = vadd.f32 %v167, %v398
    %v400 = vpop.f32.mrb[0].mxu0
    %v401 = vadd.f32 %v171, %v400
    %v402 = vpop.f32.mrb[0].mxu0
    %v403 = vpop.f32.mrb[0].mxu0
    %404 = vdwg.mxu0
    %v405 = vmax.f32 %v276, 0.0
    %v406 = vmax.f32 %v278, 0.0
    %v407 = vmax.f32 %v317, 0.0
    %v408 = vmax.f32 %v319, 0.0
    %v409 = vmax.f32 %v358, 0.0
    %v410 = vmax.f32 %v360, 0.0
    %v411 = vmax.f32 %v399, 0.0
    %v412 = vmax.f32 %v401, 0.0
    %v413 = vpack.c.bf16 %v405, %v405
    %v414 = vpack.c.bf16 %v406, %v406
    %v415 = vpack.c.bf16 %v407, %v407
    %v416 = vpack.c.bf16 %v408, %v408
    %v417 = vpack.c.bf16 %v409, %v409
    %v418 = vpack.c.bf16 %v410, %v410
    %v419 = vpack.c.bf16 %v411, %v411
    %v420 = vpack.c.bf16 %v412, %v412
    %v421 = vld [vmem:[#allocation8] sm:$0xff]
    %v422 = vld [vmem:[#allocation8 + $0x8] sm:$0xff]
    %v423 = vld [vmem:[#allocation8 + $0x10] sm:$0xff]
    %v424 = vld [vmem:[#allocation8 + $0x18] sm:$0xff]
    %v425 = vld [vmem:[#allocation8 + $0x20] sm:$0xff]
    %v426 = vld [vmem:[#allocation8 + $0x28] sm:$0xff]
    %v427 = vld [vmem:[#allocation8 + $0x30] sm:$0xff]
    %v428 = vld [vmem:[#allocation8 + $0x38] sm:$0xff]
    %v429 = vld [vmem:[#allocation8 + $0x40] sm:$0xff]
    %v430 = vld [vmem:[#allocation8 + $0x48] sm:$0xff]
    %v431 = vld [vmem:[#allocation8 + $0x50] sm:$0xff]
    %v432 = vld [vmem:[#allocation8 + $0x58] sm:$0xff]
    %v433 = vld [vmem:[#allocation8 + $0x60] sm:$0xff]
    %v434 = vld [vmem:[#allocation8 + $0x68] sm:$0xff]
    %v435 = vld [vmem:[#allocation8 + $0x70] sm:$0xff]
    %v436 = vld [vmem:[#allocation8 + $0x78] sm:$0xff]
    %v437 = vld [vmem:[#allocation8 + $0x80] sm:$0xff]
    %v438 = vld [vmem:[#allocation8 + $0x88] sm:$0xff]
    %v439 = vld [vmem:[#allocation8 + $0x90] sm:$0xff]
    %v440 = vld [vmem:[#allocation8 + $0x98] sm:$0xff]
    %v441 = vld [vmem:[#allocation8 + $0xa0] sm:$0xff]
    %v442 = vld [vmem:[#allocation8 + $0xa8] sm:$0xff]
    %v443 = vld [vmem:[#allocation8 + $0xb0] sm:$0xff]
    %v444 = vld [vmem:[#allocation8 + $0xb8] sm:$0xff]
    %v445 = vld [vmem:[#allocation8 + $0xc0] sm:$0xff]
    %v446 = vld [vmem:[#allocation8 + $0xc8] sm:$0xff]
    %v447 = vld [vmem:[#allocation8 + $0xd0] sm:$0xff]
    %v448 = vld [vmem:[#allocation8 + $0xd8] sm:$0xff]
    %v449 = vld [vmem:[#allocation8 + $0xe0] sm:$0xff]
    %v450 = vld [vmem:[#allocation8 + $0xe8] sm:$0xff]
    %v451 = vld [vmem:[#allocation8 + $0xf0] sm:$0xff]
    %v452 = vld [vmem:[#allocation8 + $0xf8] sm:$0xff]
    %v453 = vld [vmem:[#allocation8 + $0x100] sm:$0xff]
    %v454 = vld [vmem:[#allocation8 + $0x108] sm:$0xff]
    %v455 = vld [vmem:[#allocation8 + $0x110] sm:$0xff]
    %v456 = vld [vmem:[#allocation8 + $0x118] sm:$0xff]
    %v457 = vld [vmem:[#allocation8 + $0x120] sm:$0xff]
    %v458 = vld [vmem:[#allocation8 + $0x128] sm:$0xff]
    %v459 = vld [vmem:[#allocation8 + $0x130] sm:$0xff]
    %v460 = vld [vmem:[#allocation8 + $0x138] sm:$0xff]
    %v461 = vld [vmem:[#allocation8 + $0x140] sm:$0xff]
    %v462 = vld [vmem:[#allocation8 + $0x148] sm:$0xff]
    %v463 = vld [vmem:[#allocation8 + $0x150] sm:$0xff]
    %v464 = vld [vmem:[#allocation8 + $0x158] sm:$0xff]
    %v465 = vld [vmem:[#allocation8 + $0x160] sm:$0xff]
    %v466 = vld [vmem:[#allocation8 + $0x168] sm:$0xff]
    %v467 = vld [vmem:[#allocation8 + $0x170] sm:$0xff]
    %v468 = vld [vmem:[#allocation8 + $0x178] sm:$0xff]
    %v469 = vld [vmem:[#allocation8 + $0x180] sm:$0xff]
    %v470 = vld [vmem:[#allocation8 + $0x188] sm:$0xff]
    %v471 = vld [vmem:[#allocation8 + $0x190] sm:$0xff]
    %v472 = vld [vmem:[#allocation8 + $0x198] sm:$0xff]
    %v473 = vld [vmem:[#allocation8 + $0x1a0] sm:$0xff]
    %v474 = vld [vmem:[#allocation8 + $0x1a8] sm:$0xff]
    %v475 = vld [vmem:[#allocation8 + $0x1b0] sm:$0xff]
    %v476 = vld [vmem:[#allocation8 + $0x1b8] sm:$0xff]
    %v477 = vld [vmem:[#allocation8 + $0x1c0] sm:$0xff]
    %v478 = vld [vmem:[#allocation8 + $0x1c8] sm:$0xff]
    %v479 = vld [vmem:[#allocation8 + $0x1d0] sm:$0xff]
    %v480 = vld [vmem:[#allocation8 + $0x1d8] sm:$0xff]
    %v481 = vld [vmem:[#allocation8 + $0x1e0] sm:$0xff]
    %v482 = vld [vmem:[#allocation8 + $0x1e8] sm:$0xff]
    %v483 = vld [vmem:[#allocation8 + $0x1f0] sm:$0xff]
    %v484 = vld [vmem:[#allocation8 + $0x1f8] sm:$0xff]
    %v485 = vld [vmem:[#allocation8 + $0x200] sm:$0xff]
    %v486 = vld [vmem:[#allocation8 + $0x208] sm:$0xff]
    %v487 = vld [vmem:[#allocation8 + $0x210] sm:$0xff]
    %v488 = vld [vmem:[#allocation8 + $0x218] sm:$0xff]
    %v489 = vld [vmem:[#allocation8 + $0x220] sm:$0xff]
    %v490 = vld [vmem:[#allocation8 + $0x228] sm:$0xff]
    %v491 = vld [vmem:[#allocation8 + $0x230] sm:$0xff]
    %v492 = vld [vmem:[#allocation8 + $0x238] sm:$0xff]
    %v493 = vld [vmem:[#allocation8 + $0x240] sm:$0xff]
    %v494 = vld [vmem:[#allocation8 + $0x248] sm:$0xff]
    %v495 = vld [vmem:[#allocation8 + $0x250] sm:$0xff]
    %v496 = vld [vmem:[#allocation8 + $0x258] sm:$0xff]
    %v497 = vld [vmem:[#allocation8 + $0x260] sm:$0xff]
    %v498 = vld [vmem:[#allocation8 + $0x268] sm:$0xff]
    %v499 = vld [vmem:[#allocation8 + $0x270] sm:$0xff]
    %v500 = vld [vmem:[#allocation8 + $0x278] sm:$0xff]
    %v501 = vld [vmem:[#allocation8 + $0x280] sm:$0xff]
    %v502 = vld [vmem:[#allocation8 + $0x288] sm:$0xff]
    %v503 = vld [vmem:[#allocation8 + $0x290] sm:$0xff]
    %v504 = vld [vmem:[#allocation8 + $0x298] sm:$0xff]
    %v505 = vld [vmem:[#allocation8 + $0x2a0] sm:$0xff]
    %v506 = vld [vmem:[#allocation8 + $0x2a8] sm:$0xff]
    %v507 = vld [vmem:[#allocation8 + $0x2b0] sm:$0xff]
    %v508 = vld [vmem:[#allocation8 + $0x2b8] sm:$0xff]
    %v509 = vld [vmem:[#allocation8 + $0x2c0] sm:$0xff]
    %v510 = vld [vmem:[#allocation8 + $0x2c8] sm:$0xff]
    %v511 = vld [vmem:[#allocation8 + $0x2d0] sm:$0xff]
    %v512 = vld [vmem:[#allocation8 + $0x2d8] sm:$0xff]
    %v513 = vld [vmem:[#allocation8 + $0x2e0] sm:$0xff]
    %v514 = vld [vmem:[#allocation8 + $0x2e8] sm:$0xff]
    %v515 = vld [vmem:[#allocation8 + $0x2f0] sm:$0xff]
    %v516 = vld [vmem:[#allocation8 + $0x2f8] sm:$0xff]
    %v517 = vld [vmem:[#allocation8 + $0x300] sm:$0xff]
    %v518 = vld [vmem:[#allocation8 + $0x308] sm:$0xff]
    %v519 = vld [vmem:[#allocation8 + $0x310] sm:$0xff]
    %v520 = vld [vmem:[#allocation8 + $0x318] sm:$0xff]
    %v521 = vld [vmem:[#allocation8 + $0x320] sm:$0xff]
    %v522 = vld [vmem:[#allocation8 + $0x328] sm:$0xff]
    %v523 = vld [vmem:[#allocation8 + $0x330] sm:$0xff]
    %v524 = vld [vmem:[#allocation8 + $0x338] sm:$0xff]
    %v525 = vld [vmem:[#allocation8 + $0x340] sm:$0xff]
    %v526 = vld [vmem:[#allocation8 + $0x348] sm:$0xff]
    %v527 = vld [vmem:[#allocation8 + $0x350] sm:$0xff]
    %v528 = vld [vmem:[#allocation8 + $0x358] sm:$0xff]
    %v529 = vld [vmem:[#allocation8 + $0x360] sm:$0xff]
    %v530 = vld [vmem:[#allocation8 + $0x368] sm:$0xff]
    %v531 = vld [vmem:[#allocation8 + $0x370] sm:$0xff]
    %v532 = vld [vmem:[#allocation8 + $0x378] sm:$0xff]
    %v533 = vld [vmem:[#allocation8 + $0x380] sm:$0xff]
    %v534 = vld [vmem:[#allocation8 + $0x388] sm:$0xff]
    %v535 = vld [vmem:[#allocation8 + $0x390] sm:$0xff]
    %v536 = vld [vmem:[#allocation8 + $0x398] sm:$0xff]
    %v537 = vld [vmem:[#allocation8 + $0x3a0] sm:$0xff]
    %v538 = vld [vmem:[#allocation8 + $0x3a8] sm:$0xff]
    %v539 = vld [vmem:[#allocation8 + $0x3b0] sm:$0xff]
    %v540 = vld [vmem:[#allocation8 + $0x3b8] sm:$0xff]
    %v541 = vld [vmem:[#allocation8 + $0x3c0] sm:$0xff]
    %v542 = vld [vmem:[#allocation8 + $0x3c8] sm:$0xff]
    %v543 = vld [vmem:[#allocation8 + $0x3d0] sm:$0xff]
    %v544 = vld [vmem:[#allocation8 + $0x3d8] sm:$0xff]
    %v545 = vld [vmem:[#allocation8 + $0x3e0] sm:$0xff]
    %v546 = vld [vmem:[#allocation8 + $0x3e8] sm:$0xff]
    %v547 = vld [vmem:[#allocation8 + $0x3f0] sm:$0xff]
    %v548 = vld [vmem:[#allocation8 + $0x3f8] sm:$0xff]
    %v549 = vld [vmem:[#allocation8 + $0x400] sm:$0xff]
    %v550 = vld [vmem:[#allocation8 + $0x408] sm:$0xff]
    %v551 = vld [vmem:[#allocation8 + $0x410] sm:$0xff]
    %v552 = vld [vmem:[#allocation8 + $0x418] sm:$0xff]
    %v553 = vld [vmem:[#allocation8 + $0x420] sm:$0xff]
    %v554 = vld [vmem:[#allocation8 + $0x428] sm:$0xff]
    %v555 = vld [vmem:[#allocation8 + $0x430] sm:$0xff]
    %v556 = vld [vmem:[#allocation8 + $0x438] sm:$0xff]
    %v557 = vld [vmem:[#allocation8 + $0x440] sm:$0xff]
    %v558 = vld [vmem:[#allocation8 + $0x448] sm:$0xff]
    %v559 = vld [vmem:[#allocation8 + $0x450] sm:$0xff]
    %v560 = vld [vmem:[#allocation8 + $0x458] sm:$0xff]
    %v561 = vld [vmem:[#allocation8 + $0x460] sm:$0xff]
    %v562 = vld [vmem:[#allocation8 + $0x468] sm:$0xff]
    %v563 = vld [vmem:[#allocation8 + $0x470] sm:$0xff]
    %v564 = vld [vmem:[#allocation8 + $0x478] sm:$0xff]
    %v565 = vld [vmem:[#allocation8 + $0x480] sm:$0xff]
    %v566 = vld [vmem:[#allocation8 + $0x488] sm:$0xff]
    %v567 = vld [vmem:[#allocation8 + $0x490] sm:$0xff]
    %v568 = vld [vmem:[#allocation8 + $0x498] sm:$0xff]
    %v569 = vld [vmem:[#allocation8 + $0x4a0] sm:$0xff]
    %v570 = vld [vmem:[#allocation8 + $0x4a8] sm:$0xff]
    %v571 = vld [vmem:[#allocation8 + $0x4b0] sm:$0xff]
    %v572 = vld [vmem:[#allocation8 + $0x4b8] sm:$0xff]
    %v573 = vld [vmem:[#allocation8 + $0x4c0] sm:$0xff]
    %v574 = vld [vmem:[#allocation8 + $0x4c8] sm:$0xff]
    %v575 = vld [vmem:[#allocation8 + $0x4d0] sm:$0xff]
    %v576 = vld [vmem:[#allocation8 + $0x4d8] sm:$0xff]
    %v577 = vld [vmem:[#allocation8 + $0x4e0] sm:$0xff]
    %v578 = vld [vmem:[#allocation8 + $0x4e8] sm:$0xff]
    %v579 = vld [vmem:[#allocation8 + $0x4f0] sm:$0xff]
    %v580 = vld [vmem:[#allocation8 + $0x4f8] sm:$0xff]
    %v581 = vld [vmem:[#allocation8 + $0x500] sm:$0xff]
    %v582 = vld [vmem:[#allocation8 + $0x508] sm:$0xff]
    %v583 = vld [vmem:[#allocation8 + $0x510] sm:$0xff]
    %v584 = vld [vmem:[#allocation8 + $0x518] sm:$0xff]
    %v585 = vld [vmem:[#allocation8 + $0x520] sm:$0xff]
    %v586 = vld [vmem:[#allocation8 + $0x528] sm:$0xff]
    %v587 = vld [vmem:[#allocation8 + $0x530] sm:$0xff]
    %v588 = vld [vmem:[#allocation8 + $0x538] sm:$0xff]
    %v589 = vld [vmem:[#allocation8 + $0x540] sm:$0xff]
    %v590 = vld [vmem:[#allocation8 + $0x548] sm:$0xff]
    %v591 = vld [vmem:[#allocation8 + $0x550] sm:$0xff]
    %v592 = vld [vmem:[#allocation8 + $0x558] sm:$0xff]
    %v593 = vld [vmem:[#allocation8 + $0x560] sm:$0xff]
    %v594 = vld [vmem:[#allocation8 + $0x568] sm:$0xff]
    %v595 = vld [vmem:[#allocation8 + $0x570] sm:$0xff]
    %v596 = vld [vmem:[#allocation8 + $0x578] sm:$0xff]
    %v597 = vld [vmem:[#allocation8 + $0x580] sm:$0xff]
    %v598 = vld [vmem:[#allocation8 + $0x588] sm:$0xff]
    %v599 = vld [vmem:[#allocation8 + $0x590] sm:$0xff]
    %v600 = vld [vmem:[#allocation8 + $0x598] sm:$0xff]
    %v601 = vld [vmem:[#allocation8 + $0x5a0] sm:$0xff]
    %v602 = vld [vmem:[#allocation8 + $0x5a8] sm:$0xff]
    %v603 = vld [vmem:[#allocation8 + $0x5b0] sm:$0xff]
    %v604 = vld [vmem:[#allocation8 + $0x5b8] sm:$0xff]
    %v605 = vld [vmem:[#allocation8 + $0x5c0] sm:$0xff]
    %v606 = vld [vmem:[#allocation8 + $0x5c8] sm:$0xff]
    %v607 = vld [vmem:[#allocation8 + $0x5d0] sm:$0xff]
    %v608 = vld [vmem:[#allocation8 + $0x5d8] sm:$0xff]
    %v609 = vld [vmem:[#allocation8 + $0x5e0] sm:$0xff]
    %v610 = vld [vmem:[#allocation8 + $0x5e8] sm:$0xff]
    %v611 = vld [vmem:[#allocation8 + $0x5f0] sm:$0xff]
    %v612 = vld [vmem:[#allocation8 + $0x5f8] sm:$0xff]
    %v613 = vld [vmem:[#allocation8 + $0x600] sm:$0xff]
    %v614 = vld [vmem:[#allocation8 + $0x608] sm:$0xff]
    %v615 = vld [vmem:[#allocation8 + $0x610] sm:$0xff]
    %v616 = vld [vmem:[#allocation8 + $0x618] sm:$0xff]
    %v617 = vld [vmem:[#allocation8 + $0x620] sm:$0xff]
    %v618 = vld [vmem:[#allocation8 + $0x628] sm:$0xff]
    %v619 = vld [vmem:[#allocation8 + $0x630] sm:$0xff]
    %v620 = vld [vmem:[#allocation8 + $0x638] sm:$0xff]
    %v621 = vld [vmem:[#allocation8 + $0x640] sm:$0xff]
    %v622 = vld [vmem:[#allocation8 + $0x648] sm:$0xff]
    %v623 = vld [vmem:[#allocation8 + $0x650] sm:$0xff]
    %v624 = vld [vmem:[#allocation8 + $0x658] sm:$0xff]
    %v625 = vld [vmem:[#allocation8 + $0x660] sm:$0xff]
    %v626 = vld [vmem:[#allocation8 + $0x668] sm:$0xff]
    %v627 = vld [vmem:[#allocation8 + $0x670] sm:$0xff]
    %v628 = vld [vmem:[#allocation8 + $0x678] sm:$0xff]
    %v629 = vld [vmem:[#allocation8 + $0x680] sm:$0xff]
    %v630 = vld [vmem:[#allocation8 + $0x688] sm:$0xff]
    %v631 = vld [vmem:[#allocation8 + $0x690] sm:$0xff]
    %v632 = vld [vmem:[#allocation8 + $0x698] sm:$0xff]
    %v633 = vld [vmem:[#allocation8 + $0x6a0] sm:$0xff]
    %v634 = vld [vmem:[#allocation8 + $0x6a8] sm:$0xff]
    %v635 = vld [vmem:[#allocation8 + $0x6b0] sm:$0xff]
    %v636 = vld [vmem:[#allocation8 + $0x6b8] sm:$0xff]
    %v637 = vld [vmem:[#allocation8 + $0x6c0] sm:$0xff]
    %v638 = vld [vmem:[#allocation8 + $0x6c8] sm:$0xff]
    %v639 = vld [vmem:[#allocation8 + $0x6d0] sm:$0xff]
    %v640 = vld [vmem:[#allocation8 + $0x6d8] sm:$0xff]
    %v641 = vld [vmem:[#allocation8 + $0x6e0] sm:$0xff]
    %v642 = vld [vmem:[#allocation8 + $0x6e8] sm:$0xff]
    %v643 = vld [vmem:[#allocation8 + $0x6f0] sm:$0xff]
    %v644 = vld [vmem:[#allocation8 + $0x6f8] sm:$0xff]
    %v645 = vld [vmem:[#allocation8 + $0x700] sm:$0xff]
    %v646 = vld [vmem:[#allocation8 + $0x708] sm:$0xff]
    %v647 = vld [vmem:[#allocation8 + $0x710] sm:$0xff]
    %v648 = vld [vmem:[#allocation8 + $0x718] sm:$0xff]
    %v649 = vld [vmem:[#allocation8 + $0x720] sm:$0xff]
    %v650 = vld [vmem:[#allocation8 + $0x728] sm:$0xff]
    %v651 = vld [vmem:[#allocation8 + $0x730] sm:$0xff]
    %v652 = vld [vmem:[#allocation8 + $0x738] sm:$0xff]
    %v653 = vld [vmem:[#allocation8 + $0x740] sm:$0xff]
    %v654 = vld [vmem:[#allocation8 + $0x748] sm:$0xff]
    %v655 = vld [vmem:[#allocation8 + $0x750] sm:$0xff]
    %v656 = vld [vmem:[#allocation8 + $0x758] sm:$0xff]
    %v657 = vld [vmem:[#allocation8 + $0x760] sm:$0xff]
    %v658 = vld [vmem:[#allocation8 + $0x768] sm:$0xff]
    %v659 = vld [vmem:[#allocation8 + $0x770] sm:$0xff]
    %v660 = vld [vmem:[#allocation8 + $0x778] sm:$0xff]
    %v661 = vld [vmem:[#allocation8 + $0x780] sm:$0xff]
    %v662 = vld [vmem:[#allocation8 + $0x788] sm:$0xff]
    %v663 = vld [vmem:[#allocation8 + $0x790] sm:$0xff]
    %v664 = vld [vmem:[#allocation8 + $0x798] sm:$0xff]
    %v665 = vld [vmem:[#allocation8 + $0x7a0] sm:$0xff]
    %v666 = vld [vmem:[#allocation8 + $0x7a8] sm:$0xff]
    %v667 = vld [vmem:[#allocation8 + $0x7b0] sm:$0xff]
    %v668 = vld [vmem:[#allocation8 + $0x7b8] sm:$0xff]
    %v669 = vld [vmem:[#allocation8 + $0x7c0] sm:$0xff]
    %v670 = vld [vmem:[#allocation8 + $0x7c8] sm:$0xff]
    %v671 = vld [vmem:[#allocation8 + $0x7d0] sm:$0xff]
    %v672 = vld [vmem:[#allocation8 + $0x7d8] sm:$0xff]
    %v673 = vld [vmem:[#allocation8 + $0x7e0] sm:$0xff]
    %v674 = vld [vmem:[#allocation8 + $0x7e8] sm:$0xff]
    %v675 = vld [vmem:[#allocation8 + $0x7f0] sm:$0xff]
    %v676 = vld [vmem:[#allocation8 + $0x7f8] sm:$0xff]
    %v677 = vld [vmem:[%s4] sm:$0xf]
    %v679 = vlaneseq
    %v680 = vshrl.u32 %v679, 7
    %v681 = vsub.s32 0, %v680
    %v682 = vrot.slane %v677, %v681
    %v683 = vlaneseq
    %v684 = vshrl.u32 %v683, 7
    %v685 = vsub.s32 1, %v684
    %v686 = vrot.slane %v677, %v685
    %v687 = vlaneseq
    %v688 = vshrl.u32 %v687, 7
    %v689 = vsub.s32 2, %v688
    %v690 = vrot.slane %v677, %v689
    %v691 = vlaneseq
    %v692 = vshrl.u32 %v691, 7
    %v693 = vsub.s32 3, %v692
    %v694 = vrot.slane %v677, %v693
    %v955 = vunpack.c.l.b16 %v421
    %v956 = vunpack.c.h.b16 %v421
    %v957 = vunpack.c.l.b16 %v422
    %v958 = vunpack.c.h.b16 %v422
    %v959 = vunpack.c.l.b16 %v423
    %v960 = vunpack.c.h.b16 %v423
    %v961 = vunpack.c.l.b16 %v424
    %v962 = vunpack.c.h.b16 %v424
    %v963 = vunpack.c.l.b16 %v425
    %v964 = vunpack.c.h.b16 %v425
    %v965 = vunpack.c.l.b16 %v426
    %v966 = vunpack.c.h.b16 %v426
    %v967 = vunpack.c.l.b16 %v427
    %v968 = vunpack.c.h.b16 %v427
    %v969 = vunpack.c.l.b16 %v428
    %v970 = vunpack.c.h.b16 %v428
    %v971 = vunpack.c.l.b16 %v429
    %v972 = vunpack.c.h.b16 %v429
    %v973 = vunpack.c.l.b16 %v430
    %v974 = vunpack.c.h.b16 %v430
    %v975 = vunpack.c.l.b16 %v431
    %v976 = vunpack.c.h.b16 %v431
    %v977 = vunpack.c.l.b16 %v432
    %v978 = vunpack.c.h.b16 %v432
    %v979 = vunpack.c.l.b16 %v433
    %v980 = vunpack.c.h.b16 %v433
    %v981 = vunpack.c.l.b16 %v434
    %v982 = vunpack.c.h.b16 %v434
    %v983 = vunpack.c.l.b16 %v435
    %v984 = vunpack.c.h.b16 %v435
    %v985 = vunpack.c.l.b16 %v436
    %v986 = vunpack.c.h.b16 %v436
    %v987 = vunpack.c.l.b16 %v437
    %v988 = vunpack.c.h.b16 %v437
    %v989 = vunpack.c.l.b16 %v438
    %v990 = vunpack.c.h.b16 %v438
    %v991 = vunpack.c.l.b16 %v439
    %v992 = vunpack.c.h.b16 %v439
    %v993 = vunpack.c.l.b16 %v440
    %v994 = vunpack.c.h.b16 %v440
    %v995 = vunpack.c.l.b16 %v441
    %v996 = vunpack.c.h.b16 %v441
    %v997 = vunpack.c.l.b16 %v442
    %v998 = vunpack.c.h.b16 %v442
    %v999 = vunpack.c.l.b16 %v443
    %v1000 = vunpack.c.h.b16 %v443
    %v1001 = vunpack.c.l.b16 %v444
    %v1002 = vunpack.c.h.b16 %v444
    %v1003 = vunpack.c.l.b16 %v445
    %v1004 = vunpack.c.h.b16 %v445
    %v1005 = vunpack.c.l.b16 %v446
    %v1006 = vunpack.c.h.b16 %v446
    %v1007 = vunpack.c.l.b16 %v447
    %v1008 = vunpack.c.h.b16 %v447
    %v1009 = vunpack.c.l.b16 %v448
    %v1010 = vunpack.c.h.b16 %v448
    %v1011 = vunpack.c.l.b16 %v449
    %v1012 = vunpack.c.h.b16 %v449
    %v1013 = vunpack.c.l.b16 %v450
    %v1014 = vunpack.c.h.b16 %v450
    %v1015 = vunpack.c.l.b16 %v451
    %v1016 = vunpack.c.h.b16 %v451
    %v1017 = vunpack.c.l.b16 %v452
    %v1018 = vunpack.c.h.b16 %v452
    %v1019 = vunpack.c.l.b16 %v453
    %v1020 = vunpack.c.h.b16 %v453
    %v1021 = vunpack.c.l.b16 %v454
    %v1022 = vunpack.c.h.b16 %v454
    %v1023 = vunpack.c.l.b16 %v455
    %v1024 = vunpack.c.h.b16 %v455
    %v1025 = vunpack.c.l.b16 %v456
    %v1026 = vunpack.c.h.b16 %v456
    %v1027 = vunpack.c.l.b16 %v457
    %v1028 = vunpack.c.h.b16 %v457
    %v1029 = vunpack.c.l.b16 %v458
    %v1030 = vunpack.c.h.b16 %v458
    %v1031 = vunpack.c.l.b16 %v459
    %v1032 = vunpack.c.h.b16 %v459
    %v1033 = vunpack.c.l.b16 %v460
    %v1034 = vunpack.c.h.b16 %v460
    %v1035 = vunpack.c.l.b16 %v461
    %v1036 = vunpack.c.h.b16 %v461
    %v1037 = vunpack.c.l.b16 %v462
    %v1038 = vunpack.c.h.b16 %v462
    %v1039 = vunpack.c.l.b16 %v463
    %v1040 = vunpack.c.h.b16 %v463
    %v1041 = vunpack.c.l.b16 %v464
    %v1042 = vunpack.c.h.b16 %v464
    %v1043 = vunpack.c.l.b16 %v465
    %v1044 = vunpack.c.h.b16 %v465
    %v1045 = vunpack.c.l.b16 %v466
    %v1046 = vunpack.c.h.b16 %v466
    %v1047 = vunpack.c.l.b16 %v467
    %v1048 = vunpack.c.h.b16 %v467
    %v1049 = vunpack.c.l.b16 %v468
    %v1050 = vunpack.c.h.b16 %v468
    %v1051 = vunpack.c.l.b16 %v469
    %v1052 = vunpack.c.h.b16 %v469
    %v1053 = vunpack.c.l.b16 %v470
    %v1054 = vunpack.c.h.b16 %v470
    %v1055 = vunpack.c.l.b16 %v471
    %v1056 = vunpack.c.h.b16 %v471
    %v1057 = vunpack.c.l.b16 %v472
    %v1058 = vunpack.c.h.b16 %v472
    %v1059 = vunpack.c.l.b16 %v473
    %v1060 = vunpack.c.h.b16 %v473
    %v1061 = vunpack.c.l.b16 %v474
    %v1062 = vunpack.c.h.b16 %v474
    %v1063 = vunpack.c.l.b16 %v475
    %v1064 = vunpack.c.h.b16 %v475
    %v1065 = vunpack.c.l.b16 %v476
    %v1066 = vunpack.c.h.b16 %v476
    %v1067 = vunpack.c.l.b16 %v477
    %v1068 = vunpack.c.h.b16 %v477
    %v1069 = vunpack.c.l.b16 %v478
    %v1070 = vunpack.c.h.b16 %v478
    %v1071 = vunpack.c.l.b16 %v479
    %v1072 = vunpack.c.h.b16 %v479
    %v1073 = vunpack.c.l.b16 %v480
    %v1074 = vunpack.c.h.b16 %v480
    %v1075 = vunpack.c.l.b16 %v481
    %v1076 = vunpack.c.h.b16 %v481
    %v1077 = vunpack.c.l.b16 %v482
    %v1078 = vunpack.c.h.b16 %v482
    %v1079 = vunpack.c.l.b16 %v483
    %v1080 = vunpack.c.h.b16 %v483
    %v1081 = vunpack.c.l.b16 %v484
    %v1082 = vunpack.c.h.b16 %v484
    %v1083 = vunpack.c.l.b16 %v485
    %v1084 = vunpack.c.h.b16 %v485
    %v1085 = vunpack.c.l.b16 %v486
    %v1086 = vunpack.c.h.b16 %v486
    %v1087 = vunpack.c.l.b16 %v487
    %v1088 = vunpack.c.h.b16 %v487
    %v1089 = vunpack.c.l.b16 %v488
    %v1090 = vunpack.c.h.b16 %v488
    %v1091 = vunpack.c.l.b16 %v489
    %v1092 = vunpack.c.h.b16 %v489
    %v1093 = vunpack.c.l.b16 %v490
    %v1094 = vunpack.c.h.b16 %v490
    %v1095 = vunpack.c.l.b16 %v491
    %v1096 = vunpack.c.h.b16 %v491
    %v1097 = vunpack.c.l.b16 %v492
    %v1098 = vunpack.c.h.b16 %v492
    %v1099 = vunpack.c.l.b16 %v493
    %v1100 = vunpack.c.h.b16 %v493
    %v1101 = vunpack.c.l.b16 %v494
    %v1102 = vunpack.c.h.b16 %v494
    %v1103 = vunpack.c.l.b16 %v495
    %v1104 = vunpack.c.h.b16 %v495
    %v1105 = vunpack.c.l.b16 %v496
    %v1106 = vunpack.c.h.b16 %v496
    %v1107 = vunpack.c.l.b16 %v497
    %v1108 = vunpack.c.h.b16 %v497
    %v1109 = vunpack.c.l.b16 %v498
    %v1110 = vunpack.c.h.b16 %v498
    %v1111 = vunpack.c.l.b16 %v499
    %v1112 = vunpack.c.h.b16 %v499
    %v1113 = vunpack.c.l.b16 %v500
    %v1114 = vunpack.c.h.b16 %v500
    %v1115 = vunpack.c.l.b16 %v501
    %v1116 = vunpack.c.h.b16 %v501
    %v1117 = vunpack.c.l.b16 %v502
    %v1118 = vunpack.c.h.b16 %v502
    %v1119 = vunpack.c.l.b16 %v503
    %v1120 = vunpack.c.h.b16 %v503
    %v1121 = vunpack.c.l.b16 %v504
    %v1122 = vunpack.c.h.b16 %v504
    %v1123 = vunpack.c.l.b16 %v505
    %v1124 = vunpack.c.h.b16 %v505
    %v1125 = vunpack.c.l.b16 %v506
    %v1126 = vunpack.c.h.b16 %v506
    %v1127 = vunpack.c.l.b16 %v507
    %v1128 = vunpack.c.h.b16 %v507
    %v1129 = vunpack.c.l.b16 %v508
    %v1130 = vunpack.c.h.b16 %v508
    %v1131 = vunpack.c.l.b16 %v509
    %v1132 = vunpack.c.h.b16 %v509
    %v1133 = vunpack.c.l.b16 %v510
    %v1134 = vunpack.c.h.b16 %v510
    %v1135 = vunpack.c.l.b16 %v511
    %v1136 = vunpack.c.h.b16 %v511
    %v1137 = vunpack.c.l.b16 %v512
    %v1138 = vunpack.c.h.b16 %v512
    %v1139 = vunpack.c.l.b16 %v513
    %v1140 = vunpack.c.h.b16 %v513
    %v1141 = vunpack.c.l.b16 %v514
    %v1142 = vunpack.c.h.b16 %v514
    %v1143 = vunpack.c.l.b16 %v515
    %v1144 = vunpack.c.h.b16 %v515
    %v1145 = vunpack.c.l.b16 %v516
    %v1146 = vunpack.c.h.b16 %v516
    %v1147 = vunpack.c.l.b16 %v517
    %v1148 = vunpack.c.h.b16 %v517
    %v1149 = vunpack.c.l.b16 %v518
    %v1150 = vunpack.c.h.b16 %v518
    %v1151 = vunpack.c.l.b16 %v519
    %v1152 = vunpack.c.h.b16 %v519
    %v1153 = vunpack.c.l.b16 %v520
    %v1154 = vunpack.c.h.b16 %v520
    %v1155 = vunpack.c.l.b16 %v521
    %v1156 = vunpack.c.h.b16 %v521
    %v1157 = vunpack.c.l.b16 %v522
    %v1158 = vunpack.c.h.b16 %v522
    %v1159 = vunpack.c.l.b16 %v523
    %v1160 = vunpack.c.h.b16 %v523
    %v1161 = vunpack.c.l.b16 %v524
    %v1162 = vunpack.c.h.b16 %v524
    %v1163 = vunpack.c.l.b16 %v525
    %v1164 = vunpack.c.h.b16 %v525
    %v1165 = vunpack.c.l.b16 %v526
    %v1166 = vunpack.c.h.b16 %v526
    %v1167 = vunpack.c.l.b16 %v527
    %v1168 = vunpack.c.h.b16 %v527
    %v1169 = vunpack.c.l.b16 %v528
    %v1170 = vunpack.c.h.b16 %v528
    %v1171 = vunpack.c.l.b16 %v529
    %v1172 = vunpack.c.h.b16 %v529
    %v1173 = vunpack.c.l.b16 %v530
    %v1174 = vunpack.c.h.b16 %v530
    %v1175 = vunpack.c.l.b16 %v531
    %v1176 = vunpack.c.h.b16 %v531
    %v1177 = vunpack.c.l.b16 %v532
    %v1178 = vunpack.c.h.b16 %v532
    %v1179 = vunpack.c.l.b16 %v533
    %v1180 = vunpack.c.h.b16 %v533
    %v1181 = vunpack.c.l.b16 %v534
    %v1182 = vunpack.c.h.b16 %v534
    %v1183 = vunpack.c.l.b16 %v535
    %v1184 = vunpack.c.h.b16 %v535
    %v1185 = vunpack.c.l.b16 %v536
    %v1186 = vunpack.c.h.b16 %v536
    %v1187 = vunpack.c.l.b16 %v537
    %v1188 = vunpack.c.h.b16 %v537
    %v1189 = vunpack.c.l.b16 %v538
    %v1190 = vunpack.c.h.b16 %v538
    %v1191 = vunpack.c.l.b16 %v539
    %v1192 = vunpack.c.h.b16 %v539
    %v1193 = vunpack.c.l.b16 %v540
    %v1194 = vunpack.c.h.b16 %v540
    %v1195 = vunpack.c.l.b16 %v541
    %v1196 = vunpack.c.h.b16 %v541
    %v1197 = vunpack.c.l.b16 %v542
    %v1198 = vunpack.c.h.b16 %v542
    %v1199 = vunpack.c.l.b16 %v543
    %v1200 = vunpack.c.h.b16 %v543
    %v1201 = vunpack.c.l.b16 %v544
    %v1202 = vunpack.c.h.b16 %v544
    %v1203 = vunpack.c.l.b16 %v545
    %v1204 = vunpack.c.h.b16 %v545
    %v1205 = vunpack.c.l.b16 %v546
    %v1206 = vunpack.c.h.b16 %v546
    %v1207 = vunpack.c.l.b16 %v547
    %v1208 = vunpack.c.h.b16 %v547
    %v1209 = vunpack.c.l.b16 %v548
    %v1210 = vunpack.c.h.b16 %v548
    %v1211 = vunpack.c.l.b16 %v549
    %v1212 = vunpack.c.h.b16 %v549
    %v1213 = vunpack.c.l.b16 %v550
    %v1214 = vunpack.c.h.b16 %v550
    %v1215 = vunpack.c.l.b16 %v551
    %v1216 = vunpack.c.h.b16 %v551
    %v1217 = vunpack.c.l.b16 %v552
    %v1218 = vunpack.c.h.b16 %v552
    %v1219 = vunpack.c.l.b16 %v553
    %v1220 = vunpack.c.h.b16 %v553
    %v1221 = vunpack.c.l.b16 %v554
    %v1222 = vunpack.c.h.b16 %v554
    %v1223 = vunpack.c.l.b16 %v555
    %v1224 = vunpack.c.h.b16 %v555
    %v1225 = vunpack.c.l.b16 %v556
    %v1226 = vunpack.c.h.b16 %v556
    %v1227 = vunpack.c.l.b16 %v557
    %v1228 = vunpack.c.h.b16 %v557
    %v1229 = vunpack.c.l.b16 %v558
    %v1230 = vunpack.c.h.b16 %v558
    %v1231 = vunpack.c.l.b16 %v559
    %v1232 = vunpack.c.h.b16 %v559
    %v1233 = vunpack.c.l.b16 %v560
    %v1234 = vunpack.c.h.b16 %v560
    %v1235 = vunpack.c.l.b16 %v561
    %v1236 = vunpack.c.h.b16 %v561
    %v1237 = vunpack.c.l.b16 %v562
    %v1238 = vunpack.c.h.b16 %v562
    %v1239 = vunpack.c.l.b16 %v563
    %v1240 = vunpack.c.h.b16 %v563
    %v1241 = vunpack.c.l.b16 %v564
    %v1242 = vunpack.c.h.b16 %v564
    %v1243 = vunpack.c.l.b16 %v565
    %v1244 = vunpack.c.h.b16 %v565
    %v1245 = vunpack.c.l.b16 %v566
    %v1246 = vunpack.c.h.b16 %v566
    %v1247 = vunpack.c.l.b16 %v567
    %v1248 = vunpack.c.h.b16 %v567
    %v1249 = vunpack.c.l.b16 %v568
    %v1250 = vunpack.c.h.b16 %v568
    %v1251 = vunpack.c.l.b16 %v569
    %v1252 = vunpack.c.h.b16 %v569
    %v1253 = vunpack.c.l.b16 %v570
    %v1254 = vunpack.c.h.b16 %v570
    %v1255 = vunpack.c.l.b16 %v571
    %v1256 = vunpack.c.h.b16 %v571
    %v1257 = vunpack.c.l.b16 %v572
    %v1258 = vunpack.c.h.b16 %v572
    %v1259 = vunpack.c.l.b16 %v573
    %v1260 = vunpack.c.h.b16 %v573
    %v1261 = vunpack.c.l.b16 %v574
    %v1262 = vunpack.c.h.b16 %v574
    %v1263 = vunpack.c.l.b16 %v575
    %v1264 = vunpack.c.h.b16 %v575
    %v1265 = vunpack.c.l.b16 %v576
    %v1266 = vunpack.c.h.b16 %v576
    %v1267 = vunpack.c.l.b16 %v577
    %v1268 = vunpack.c.h.b16 %v577
    %v1269 = vunpack.c.l.b16 %v578
    %v1270 = vunpack.c.h.b16 %v578
    %v1271 = vunpack.c.l.b16 %v579
    %v1272 = vunpack.c.h.b16 %v579
    %v1273 = vunpack.c.l.b16 %v580
    %v1274 = vunpack.c.h.b16 %v580
    %v1275 = vunpack.c.l.b16 %v581
    %v1276 = vunpack.c.h.b16 %v581
    %v1277 = vunpack.c.l.b16 %v582
    %v1278 = vunpack.c.h.b16 %v582
    %v1279 = vunpack.c.l.b16 %v583
    %v1280 = vunpack.c.h.b16 %v583
    %v1281 = vunpack.c.l.b16 %v584
    %v1282 = vunpack.c.h.b16 %v584
    %v1283 = vunpack.c.l.b16 %v585
    %v1284 = vunpack.c.h.b16 %v585
    %v1285 = vunpack.c.l.b16 %v586
    %v1286 = vunpack.c.h.b16 %v586
    %v1287 = vunpack.c.l.b16 %v587
    %v1288 = vunpack.c.h.b16 %v587
    %v1289 = vunpack.c.l.b16 %v588
    %v1290 = vunpack.c.h.b16 %v588
    %v1291 = vunpack.c.l.b16 %v589
    %v1292 = vunpack.c.h.b16 %v589
    %v1293 = vunpack.c.l.b16 %v590
    %v1294 = vunpack.c.h.b16 %v590
    %v1295 = vunpack.c.l.b16 %v591
    %v1296 = vunpack.c.h.b16 %v591
    %v1297 = vunpack.c.l.b16 %v592
    %v1298 = vunpack.c.h.b16 %v592
    %v1299 = vunpack.c.l.b16 %v593
    %v1300 = vunpack.c.h.b16 %v593
    %v1301 = vunpack.c.l.b16 %v594
    %v1302 = vunpack.c.h.b16 %v594
    %v1303 = vunpack.c.l.b16 %v595
    %v1304 = vunpack.c.h.b16 %v595
    %v1305 = vunpack.c.l.b16 %v596
    %v1306 = vunpack.c.h.b16 %v596
    %v1307 = vunpack.c.l.b16 %v597
    %v1308 = vunpack.c.h.b16 %v597
    %v1309 = vunpack.c.l.b16 %v598
    %v1310 = vunpack.c.h.b16 %v598
    %v1311 = vunpack.c.l.b16 %v599
    %v1312 = vunpack.c.h.b16 %v599
    %v1313 = vunpack.c.l.b16 %v600
    %v1314 = vunpack.c.h.b16 %v600
    %v1315 = vunpack.c.l.b16 %v601
    %v1316 = vunpack.c.h.b16 %v601
    %v1317 = vunpack.c.l.b16 %v602
    %v1318 = vunpack.c.h.b16 %v602
    %v1319 = vunpack.c.l.b16 %v603
    %v1320 = vunpack.c.h.b16 %v603
    %v1321 = vunpack.c.l.b16 %v604
    %v1322 = vunpack.c.h.b16 %v604
    %v1323 = vunpack.c.l.b16 %v605
    %v1324 = vunpack.c.h.b16 %v605
    %v1325 = vunpack.c.l.b16 %v606
    %v1326 = vunpack.c.h.b16 %v606
    %v1327 = vunpack.c.l.b16 %v607
    %v1328 = vunpack.c.h.b16 %v607
    %v1329 = vunpack.c.l.b16 %v608
    %v1330 = vunpack.c.h.b16 %v608
    %v1331 = vunpack.c.l.b16 %v609
    %v1332 = vunpack.c.h.b16 %v609
    %v1333 = vunpack.c.l.b16 %v610
    %v1334 = vunpack.c.h.b16 %v610
    %v1335 = vunpack.c.l.b16 %v611
    %v1336 = vunpack.c.h.b16 %v611
    %v1337 = vunpack.c.l.b16 %v612
    %v1338 = vunpack.c.h.b16 %v612
    %v1339 = vunpack.c.l.b16 %v613
    %v1340 = vunpack.c.h.b16 %v613
    %v1341 = vunpack.c.l.b16 %v614
    %v1342 = vunpack.c.h.b16 %v614
    %v1343 = vunpack.c.l.b16 %v615
    %v1344 = vunpack.c.h.b16 %v615
    %v1345 = vunpack.c.l.b16 %v616
    %v1346 = vunpack.c.h.b16 %v616
    %v1347 = vunpack.c.l.b16 %v617
    %v1348 = vunpack.c.h.b16 %v617
    %v1349 = vunpack.c.l.b16 %v618
    %v1350 = vunpack.c.h.b16 %v618
    %v1351 = vunpack.c.l.b16 %v619
    %v1352 = vunpack.c.h.b16 %v619
    %v1353 = vunpack.c.l.b16 %v620
    %v1354 = vunpack.c.h.b16 %v620
    %v1355 = vunpack.c.l.b16 %v621
    %v1356 = vunpack.c.h.b16 %v621
    %v1357 = vunpack.c.l.b16 %v622
    %v1358 = vunpack.c.h.b16 %v622
    %v1359 = vunpack.c.l.b16 %v623
    %v1360 = vunpack.c.h.b16 %v623
    %v1361 = vunpack.c.l.b16 %v624
    %v1362 = vunpack.c.h.b16 %v624
    %v1363 = vunpack.c.l.b16 %v625
    %v1364 = vunpack.c.h.b16 %v625
    %v1365 = vunpack.c.l.b16 %v626
    %v1366 = vunpack.c.h.b16 %v626
    %v1367 = vunpack.c.l.b16 %v627
    %v1368 = vunpack.c.h.b16 %v627
    %v1369 = vunpack.c.l.b16 %v628
    %v1370 = vunpack.c.h.b16 %v628
    %v1371 = vunpack.c.l.b16 %v629
    %v1372 = vunpack.c.h.b16 %v629
    %v1373 = vunpack.c.l.b16 %v630
    %v1374 = vunpack.c.h.b16 %v630
    %v1375 = vunpack.c.l.b16 %v631
    %v1376 = vunpack.c.h.b16 %v631
    %v1377 = vunpack.c.l.b16 %v632
    %v1378 = vunpack.c.h.b16 %v632
    %v1379 = vunpack.c.l.b16 %v633
    %v1380 = vunpack.c.h.b16 %v633
    %v1381 = vunpack.c.l.b16 %v634
    %v1382 = vunpack.c.h.b16 %v634
    %v1383 = vunpack.c.l.b16 %v635
    %v1384 = vunpack.c.h.b16 %v635
    %v1385 = vunpack.c.l.b16 %v636
    %v1386 = vunpack.c.h.b16 %v636
    %v1387 = vunpack.c.l.b16 %v637
    %v1388 = vunpack.c.h.b16 %v637
    %v1389 = vunpack.c.l.b16 %v638
    %v1390 = vunpack.c.h.b16 %v638
    %v1391 = vunpack.c.l.b16 %v639
    %v1392 = vunpack.c.h.b16 %v639
    %v1393 = vunpack.c.l.b16 %v640
    %v1394 = vunpack.c.h.b16 %v640
    %v1395 = vunpack.c.l.b16 %v641
    %v1396 = vunpack.c.h.b16 %v641
    %v1397 = vunpack.c.l.b16 %v642
    %v1398 = vunpack.c.h.b16 %v642
    %v1399 = vunpack.c.l.b16 %v643
    %v1400 = vunpack.c.h.b16 %v643
    %v1401 = vunpack.c.l.b16 %v644
    %v1402 = vunpack.c.h.b16 %v644
    %v1403 = vunpack.c.l.b16 %v645
    %v1404 = vunpack.c.h.b16 %v645
    %v1405 = vunpack.c.l.b16 %v646
    %v1406 = vunpack.c.h.b16 %v646
    %v1407 = vunpack.c.l.b16 %v647
    %v1408 = vunpack.c.h.b16 %v647
    %v1409 = vunpack.c.l.b16 %v648
    %v1410 = vunpack.c.h.b16 %v648
    %v1411 = vunpack.c.l.b16 %v649
    %v1412 = vunpack.c.h.b16 %v649
    %v1413 = vunpack.c.l.b16 %v650
    %v1414 = vunpack.c.h.b16 %v650
    %v1415 = vunpack.c.l.b16 %v651
    %v1416 = vunpack.c.h.b16 %v651
    %v1417 = vunpack.c.l.b16 %v652
    %v1418 = vunpack.c.h.b16 %v652
    %v1419 = vunpack.c.l.b16 %v653
    %v1420 = vunpack.c.h.b16 %v653
    %v1421 = vunpack.c.l.b16 %v654
    %v1422 = vunpack.c.h.b16 %v654
    %v1423 = vunpack.c.l.b16 %v655
    %v1424 = vunpack.c.h.b16 %v655
    %v1425 = vunpack.c.l.b16 %v656
    %v1426 = vunpack.c.h.b16 %v656
    %v1427 = vunpack.c.l.b16 %v657
    %v1428 = vunpack.c.h.b16 %v657
    %v1429 = vunpack.c.l.b16 %v658
    %v1430 = vunpack.c.h.b16 %v658
    %v1431 = vunpack.c.l.b16 %v659
    %v1432 = vunpack.c.h.b16 %v659
    %v1433 = vunpack.c.l.b16 %v660
    %v1434 = vunpack.c.h.b16 %v660
    %v1435 = vunpack.c.l.b16 %v661
    %v1436 = vunpack.c.h.b16 %v661
    %v1437 = vunpack.c.l.b16 %v662
    %v1438 = vunpack.c.h.b16 %v662
    %v1439 = vunpack.c.l.b16 %v663
    %v1440 = vunpack.c.h.b16 %v663
    %v1441 = vunpack.c.l.b16 %v664
    %v1442 = vunpack.c.h.b16 %v664
    %v1443 = vunpack.c.l.b16 %v665
    %v1444 = vunpack.c.h.b16 %v665
    %v1445 = vunpack.c.l.b16 %v666
    %v1446 = vunpack.c.h.b16 %v666
    %v1447 = vunpack.c.l.b16 %v667
    %v1448 = vunpack.c.h.b16 %v667
    %v1449 = vunpack.c.l.b16 %v668
    %v1450 = vunpack.c.h.b16 %v668
    %v1451 = vunpack.c.l.b16 %v669
    %v1452 = vunpack.c.h.b16 %v669
    %v1453 = vunpack.c.l.b16 %v670
    %v1454 = vunpack.c.h.b16 %v670
    %v1455 = vunpack.c.l.b16 %v671
    %v1456 = vunpack.c.h.b16 %v671
    %v1457 = vunpack.c.l.b16 %v672
    %v1458 = vunpack.c.h.b16 %v672
    %v1459 = vunpack.c.l.b16 %v673
    %v1460 = vunpack.c.h.b16 %v673
    %v1461 = vunpack.c.l.b16 %v674
    %v1462 = vunpack.c.h.b16 %v674
    %v1463 = vunpack.c.l.b16 %v675
    %v1464 = vunpack.c.h.b16 %v675
    %v1465 = vunpack.c.l.b16 %v676
    %v1466 = vunpack.c.h.b16 %v676
    %v1467 = vpack.c.b16 %v959, %v955
    %v1468 = vpack.c.b16 %v960, %v956
    %v1469 = vpack.c.b16 %v961, %v957
    %v1470 = vpack.c.b16 %v962, %v958
    %v1471 = vpack.c.b16 %v967, %v963
    %v1472 = vpack.c.b16 %v968, %v964
    %v1473 = vpack.c.b16 %v969, %v965
    %v1474 = vpack.c.b16 %v970, %v966
    %v1475 = vpack.c.b16 %v975, %v971
    %v1476 = vpack.c.b16 %v976, %v972
    %v1477 = vpack.c.b16 %v977, %v973
    %v1478 = vpack.c.b16 %v978, %v974
    %v1479 = vpack.c.b16 %v983, %v979
    %v1480 = vpack.c.b16 %v984, %v980
    %v1481 = vpack.c.b16 %v985, %v981
    %v1482 = vpack.c.b16 %v986, %v982
    %v1483 = vpack.c.b16 %v991, %v987
    %v1484 = vpack.c.b16 %v992, %v988
    %v1485 = vpack.c.b16 %v993, %v989
    %v1486 = vpack.c.b16 %v994, %v990
    %v1487 = vpack.c.b16 %v999, %v995
    %v1488 = vpack.c.b16 %v1000, %v996
    %v1489 = vpack.c.b16 %v1001, %v997
    %v1490 = vpack.c.b16 %v1002, %v998
    %v1491 = vpack.c.b16 %v1007, %v1003
    %v1492 = vpack.c.b16 %v1008, %v1004
    %v1493 = vpack.c.b16 %v1009, %v1005
    %v1494 = vpack.c.b16 %v1010, %v1006
    %v1495 = vpack.c.b16 %v1015, %v1011
    %v1496 = vpack.c.b16 %v1016, %v1012
    %v1497 = vpack.c.b16 %v1017, %v1013
    %v1498 = vpack.c.b16 %v1018, %v1014
    %v1499 = vpack.c.b16 %v1023, %v1019
    %v1500 = vpack.c.b16 %v1024, %v1020
    %v1501 = vpack.c.b16 %v1025, %v1021
    %v1502 = vpack.c.b16 %v1026, %v1022
    %v1503 = vpack.c.b16 %v1031, %v1027
    %v1504 = vpack.c.b16 %v1032, %v1028
    %v1505 = vpack.c.b16 %v1033, %v1029
    %v1506 = vpack.c.b16 %v1034, %v1030
    %v1507 = vpack.c.b16 %v1039, %v1035
    %v1508 = vpack.c.b16 %v1040, %v1036
    %v1509 = vpack.c.b16 %v1041, %v1037
    %v1510 = vpack.c.b16 %v1042, %v1038
    %v1511 = vpack.c.b16 %v1047, %v1043
    %v1512 = vpack.c.b16 %v1048, %v1044
    %v1513 = vpack.c.b16 %v1049, %v1045
    %v1514 = vpack.c.b16 %v1050, %v1046
    %v1515 = vpack.c.b16 %v1055, %v1051
    %v1516 = vpack.c.b16 %v1056, %v1052
    %v1517 = vpack.c.b16 %v1057, %v1053
    %v1518 = vpack.c.b16 %v1058, %v1054
    %v1519 = vpack.c.b16 %v1063, %v1059
    %v1520 = vpack.c.b16 %v1064, %v1060
    %v1521 = vpack.c.b16 %v1065, %v1061
    %v1522 = vpack.c.b16 %v1066, %v1062
    %v1523 = vpack.c.b16 %v1071, %v1067
    %v1524 = vpack.c.b16 %v1072, %v1068
    %v1525 = vpack.c.b16 %v1073, %v1069
    %v1526 = vpack.c.b16 %v1074, %v1070
    %v1527 = vpack.c.b16 %v1079, %v1075
    %v1528 = vpack.c.b16 %v1080, %v1076
    %v1529 = vpack.c.b16 %v1081, %v1077
    %v1530 = vpack.c.b16 %v1082, %v1078
    %v1531 = vpack.c.b16 %v1087, %v1083
    %v1532 = vpack.c.b16 %v1088, %v1084
    %v1533 = vpack.c.b16 %v1089, %v1085
    %v1534 = vpack.c.b16 %v1090, %v1086
    %v1535 = vpack.c.b16 %v1095, %v1091
    %v1536 = vpack.c.b16 %v1096, %v1092
    %v1537 = vpack.c.b16 %v1097, %v1093
    %v1538 = vpack.c.b16 %v1098, %v1094
    %v1539 = vpack.c.b16 %v1103, %v1099
    %v1540 = vpack.c.b16 %v1104, %v1100
    %v1541 = vpack.c.b16 %v1105, %v1101
    %v1542 = vpack.c.b16 %v1106, %v1102
    %v1543 = vpack.c.b16 %v1111, %v1107
    %v1544 = vpack.c.b16 %v1112, %v1108
    %v1545 = vpack.c.b16 %v1113, %v1109
    %v1546 = vpack.c.b16 %v1114, %v1110
    %v1547 = vpack.c.b16 %v1119, %v1115
    %v1548 = vpack.c.b16 %v1120, %v1116
    %v1549 = vpack.c.b16 %v1121, %v1117
    %v1550 = vpack.c.b16 %v1122, %v1118
    %v1551 = vpack.c.b16 %v1127, %v1123
    %v1552 = vpack.c.b16 %v1128, %v1124
    %v1553 = vpack.c.b16 %v1129, %v1125
    %v1554 = vpack.c.b16 %v1130, %v1126
    %v1555 = vpack.c.b16 %v1135, %v1131
    %v1556 = vpack.c.b16 %v1136, %v1132
    %v1557 = vpack.c.b16 %v1137, %v1133
    %v1558 = vpack.c.b16 %v1138, %v1134
    %v1559 = vpack.c.b16 %v1143, %v1139
    %v1560 = vpack.c.b16 %v1144, %v1140
    %v1561 = vpack.c.b16 %v1145, %v1141
    %v1562 = vpack.c.b16 %v1146, %v1142
    %v1563 = vpack.c.b16 %v1151, %v1147
    %v1564 = vpack.c.b16 %v1152, %v1148
    %v1565 = vpack.c.b16 %v1153, %v1149
    %v1566 = vpack.c.b16 %v1154, %v1150
    %v1567 = vpack.c.b16 %v1159, %v1155
    %v1568 = vpack.c.b16 %v1160, %v1156
    %v1569 = vpack.c.b16 %v1161, %v1157
    %v1570 = vpack.c.b16 %v1162, %v1158
    %v1571 = vpack.c.b16 %v1167, %v1163
    %v1572 = vpack.c.b16 %v1168, %v1164
    %v1573 = vpack.c.b16 %v1169, %v1165
    %v1574 = vpack.c.b16 %v1170, %v1166
    %v1575 = vpack.c.b16 %v1175, %v1171
    %v1576 = vpack.c.b16 %v1176, %v1172
    %v1577 = vpack.c.b16 %v1177, %v1173
    %v1578 = vpack.c.b16 %v1178, %v1174
    %v1579 = vpack.c.b16 %v1183, %v1179
    %v1580 = vpack.c.b16 %v1184, %v1180
    %v1581 = vpack.c.b16 %v1185, %v1181
    %v1582 = vpack.c.b16 %v1186, %v1182
    %v1583 = vpack.c.b16 %v1191, %v1187
    %v1584 = vpack.c.b16 %v1192, %v1188
    %v1585 = vpack.c.b16 %v1193, %v1189
    %v1586 = vpack.c.b16 %v1194, %v1190
    %v1587 = vpack.c.b16 %v1199, %v1195
    %v1588 = vpack.c.b16 %v1200, %v1196
    %v1589 = vpack.c.b16 %v1201, %v1197
    %v1590 = vpack.c.b16 %v1202, %v1198
    %v1591 = vpack.c.b16 %v1207, %v1203
    %v1592 = vpack.c.b16 %v1208, %v1204
    %v1593 = vpack.c.b16 %v1209, %v1205
    %v1594 = vpack.c.b16 %v1210, %v1206
    %v1595 = vpack.c.b16 %v1215, %v1211
    %v1596 = vpack.c.b16 %v1216, %v1212
    %v1597 = vpack.c.b16 %v1217, %v1213
    %v1598 = vpack.c.b16 %v1218, %v1214
    %v1599 = vpack.c.b16 %v1223, %v1219
    %v1600 = vpack.c.b16 %v1224, %v1220
    %v1601 = vpack.c.b16 %v1225, %v1221
    %v1602 = vpack.c.b16 %v1226, %v1222
    %v1603 = vpack.c.b16 %v1231, %v1227
    %v1604 = vpack.c.b16 %v1232, %v1228
    %v1605 = vpack.c.b16 %v1233, %v1229
    %v1606 = vpack.c.b16 %v1234, %v1230
    %v1607 = vpack.c.b16 %v1239, %v1235
    %v1608 = vpack.c.b16 %v1240, %v1236
    %v1609 = vpack.c.b16 %v1241, %v1237
    %v1610 = vpack.c.b16 %v1242, %v1238
    %v1611 = vpack.c.b16 %v1247, %v1243
    %v1612 = vpack.c.b16 %v1248, %v1244
    %v1613 = vpack.c.b16 %v1249, %v1245
    %v1614 = vpack.c.b16 %v1250, %v1246
    %v1615 = vpack.c.b16 %v1255, %v1251
    %v1616 = vpack.c.b16 %v1256, %v1252
    %v1617 = vpack.c.b16 %v1257, %v1253
    %v1618 = vpack.c.b16 %v1258, %v1254
    %v1619 = vpack.c.b16 %v1263, %v1259
    %v1620 = vpack.c.b16 %v1264, %v1260
    %v1621 = vpack.c.b16 %v1265, %v1261
    %v1622 = vpack.c.b16 %v1266, %v1262
    %v1623 = vpack.c.b16 %v1271, %v1267
    %v1624 = vpack.c.b16 %v1272, %v1268
    %v1625 = vpack.c.b16 %v1273, %v1269
    %v1626 = vpack.c.b16 %v1274, %v1270
    %v1627 = vpack.c.b16 %v1279, %v1275
    %v1628 = vpack.c.b16 %v1280, %v1276
    %v1629 = vpack.c.b16 %v1281, %v1277
    %v1630 = vpack.c.b16 %v1282, %v1278
    %v1631 = vpack.c.b16 %v1287, %v1283
    %v1632 = vpack.c.b16 %v1288, %v1284
    %v1633 = vpack.c.b16 %v1289, %v1285
    %v1634 = vpack.c.b16 %v1290, %v1286
    %v1635 = vpack.c.b16 %v1295, %v1291
    %v1636 = vpack.c.b16 %v1296, %v1292
    %v1637 = vpack.c.b16 %v1297, %v1293
    %v1638 = vpack.c.b16 %v1298, %v1294
    %v1639 = vpack.c.b16 %v1303, %v1299
    %v1640 = vpack.c.b16 %v1304, %v1300
    %v1641 = vpack.c.b16 %v1305, %v1301
    %v1642 = vpack.c.b16 %v1306, %v1302
    %v1643 = vpack.c.b16 %v1311, %v1307
    %v1644 = vpack.c.b16 %v1312, %v1308
    %v1645 = vpack.c.b16 %v1313, %v1309
    %v1646 = vpack.c.b16 %v1314, %v1310
    %v1647 = vpack.c.b16 %v1319, %v1315
    %v1648 = vpack.c.b16 %v1320, %v1316
    %v1649 = vpack.c.b16 %v1321, %v1317
    %v1650 = vpack.c.b16 %v1322, %v1318
    %v1651 = vpack.c.b16 %v1327, %v1323
    %v1652 = vpack.c.b16 %v1328, %v1324
    %v1653 = vpack.c.b16 %v1329, %v1325
    %v1654 = vpack.c.b16 %v1330, %v1326
    %v1655 = vpack.c.b16 %v1335, %v1331
    %v1656 = vpack.c.b16 %v1336, %v1332
    %v1657 = vpack.c.b16 %v1337, %v1333
    %v1658 = vpack.c.b16 %v1338, %v1334
    %v1659 = vpack.c.b16 %v1343, %v1339
    %v1660 = vpack.c.b16 %v1344, %v1340
    %v1661 = vpack.c.b16 %v1345, %v1341
    %v1662 = vpack.c.b16 %v1346, %v1342
    %v1663 = vpack.c.b16 %v1351, %v1347
    %v1664 = vpack.c.b16 %v1352, %v1348
    %v1665 = vpack.c.b16 %v1353, %v1349
    %v1666 = vpack.c.b16 %v1354, %v1350
    %v1667 = vpack.c.b16 %v1359, %v1355
    %v1668 = vpack.c.b16 %v1360, %v1356
    %v1669 = vpack.c.b16 %v1361, %v1357
    %v1670 = vpack.c.b16 %v1362, %v1358
    %v1671 = vpack.c.b16 %v1367, %v1363
    %v1672 = vpack.c.b16 %v1368, %v1364
    %v1673 = vpack.c.b16 %v1369, %v1365
    %v1674 = vpack.c.b16 %v1370, %v1366
    %v1675 = vpack.c.b16 %v1375, %v1371
    %v1676 = vpack.c.b16 %v1376, %v1372
    %v1677 = vpack.c.b16 %v1377, %v1373
    %v1678 = vpack.c.b16 %v1378, %v1374
    %v1679 = vpack.c.b16 %v1383, %v1379
    %v1680 = vpack.c.b16 %v1384, %v1380
    %v1681 = vpack.c.b16 %v1385, %v1381
    %v1682 = vpack.c.b16 %v1386, %v1382
    %v1683 = vpack.c.b16 %v1391, %v1387
    %v1684 = vpack.c.b16 %v1392, %v1388
    %v1685 = vpack.c.b16 %v1393, %v1389
    %v1686 = vpack.c.b16 %v1394, %v1390
    %v1687 = vpack.c.b16 %v1399, %v1395
    %v1688 = vpack.c.b16 %v1400, %v1396
    %v1689 = vpack.c.b16 %v1401, %v1397
    %v1690 = vpack.c.b16 %v1402, %v1398
    %v1691 = vpack.c.b16 %v1407, %v1403
    %v1692 = vpack.c.b16 %v1408, %v1404
    %v1693 = vpack.c.b16 %v1409, %v1405
    %v1694 = vpack.c.b16 %v1410, %v1406
    %v1695 = vpack.c.b16 %v1415, %v1411
    %v1696 = vpack.c.b16 %v1416, %v1412
    %v1697 = vpack.c.b16 %v1417, %v1413
    %v1698 = vpack.c.b16 %v1418, %v1414
    %v1699 = vpack.c.b16 %v1423, %v1419
    %v1700 = vpack.c.b16 %v1424, %v1420
    %v1701 = vpack.c.b16 %v1425, %v1421
    %v1702 = vpack.c.b16 %v1426, %v1422
    %v1703 = vpack.c.b16 %v1431, %v1427
    %v1704 = vpack.c.b16 %v1432, %v1428
    %v1705 = vpack.c.b16 %v1433, %v1429
    %v1706 = vpack.c.b16 %v1434, %v1430
    %v1707 = vpack.c.b16 %v1439, %v1435
    %v1708 = vpack.c.b16 %v1440, %v1436
    %v1709 = vpack.c.b16 %v1441, %v1437
    %v1710 = vpack.c.b16 %v1442, %v1438
    %v1711 = vpack.c.b16 %v1447, %v1443
    %v1712 = vpack.c.b16 %v1448, %v1444
    %v1713 = vpack.c.b16 %v1449, %v1445
    %v1714 = vpack.c.b16 %v1450, %v1446
    %v1715 = vpack.c.b16 %v1455, %v1451
    %v1716 = vpack.c.b16 %v1456, %v1452
    %v1717 = vpack.c.b16 %v1457, %v1453
    %v1718 = vpack.c.b16 %v1458, %v1454
    %v1719 = vpack.c.b16 %v1463, %v1459
    %v1720 = vpack.c.b16 %v1464, %v1460
    %v1721 = vpack.c.b16 %v1465, %v1461
    %v1722 = vpack.c.b16 %v1466, %v1462
    %1979 = vmatprep.subr.bf16.mxu0 %v1468
    %1980 = vmatpush1.bf16.msra.mxu0 %v1467
    %1981 = vmatprep.subr.bf16.mxu0 %v1472
    %1982 = vmatpush1.bf16.msra.mxu0 %v1471
    %1983 = vmatprep.subr.bf16.mxu0 %v1476
    %1984 = vmatpush1.bf16.msra.mxu0 %v1475
    %1985 = vmatprep.subr.bf16.mxu0 %v1480
    %1986 = vmatpush1.bf16.msra.mxu0 %v1479
    %1987 = vmatprep.subr.bf16.mxu0 %v1484
    %1988 = vmatpush1.bf16.msra.mxu0 %v1483
    %1989 = vmatprep.subr.bf16.mxu0 %v1488
    %1990 = vmatpush1.bf16.msra.mxu0 %v1487
    %1991 = vmatprep.subr.bf16.mxu0 %v1492
    %1992 = vmatpush1.bf16.msra.mxu0 %v1491
    %1993 = vmatprep.subr.bf16.mxu0 %v1496
    %1994 = vmatpush1.bf16.msra.mxu0 %v1495
    %1995 = vmatprep.subr.bf16.mxu0 %v1500
    %1996 = vmatpush1.bf16.msra.mxu0 %v1499
    %1997 = vmatprep.subr.bf16.mxu0 %v1504
    %1998 = vmatpush1.bf16.msra.mxu0 %v1503
    %1999 = vmatprep.subr.bf16.mxu0 %v1508
    %2000 = vmatpush1.bf16.msra.mxu0 %v1507
    %2001 = vmatprep.subr.bf16.mxu0 %v1512
    %2002 = vmatpush1.bf16.msra.mxu0 %v1511
    %2003 = vmatprep.subr.bf16.mxu0 %v1516
    %2004 = vmatpush1.bf16.msra.mxu0 %v1515
    %2005 = vmatprep.subr.bf16.mxu0 %v1520
    %2006 = vmatpush1.bf16.msra.mxu0 %v1519
    %2007 = vmatprep.subr.bf16.mxu0 %v1524
    %2008 = vmatpush1.bf16.msra.mxu0 %v1523
    %2009 = vmatprep.subr.bf16.mxu0 %v1528
    %2010 = vmatpush1.bf16.msra.mxu0 %v1527
    %2011 = vmatprep.mubr.bf16.mxu0 %v414
    %2012 = vmatmul.mubr.bf16.gmra.mrb[0].mxu0 %v413
    %v2013 = vpop.f32.mrb[0].mxu0
    %v2014 = vadd.f32 %v682, %v2013
    %v2015 = vpop.f32.mrb[0].mxu0
    %v2016 = vadd.f32 %v686, %v2015
    %v2017 = vpop.f32.mrb[0].mxu0
    %v2018 = vpop.f32.mrb[0].mxu0
    %2019 = vdwg.mxu0
    %2020 = vmatprep.subr.bf16.mxu0 %v1532
    %2021 = vmatpush1.bf16.msra.mxu0 %v1531
    %2022 = vmatprep.subr.bf16.mxu0 %v1536
    %2023 = vmatpush1.bf16.msra.mxu0 %v1535
    %2024 = vmatprep.subr.bf16.mxu0 %v1540
    %2025 = vmatpush1.bf16.msra.mxu0 %v1539
    %2026 = vmatprep.subr.bf16.mxu0 %v1544
    %2027 = vmatpush1.bf16.msra.mxu0 %v1543
    %2028 = vmatprep.subr.bf16.mxu0 %v1548
    %2029 = vmatpush1.bf16.msra.mxu0 %v1547
    %2030 = vmatprep.subr.bf16.mxu0 %v1552
    %2031 = vmatpush1.bf16.msra.mxu0 %v1551
    %2032 = vmatprep.subr.bf16.mxu0 %v1556
    %2033 = vmatpush1.bf16.msra.mxu0 %v1555
    %2034 = vmatprep.subr.bf16.mxu0 %v1560
    %2035 = vmatpush1.bf16.msra.mxu0 %v1559
    %2036 = vmatprep.subr.bf16.mxu0 %v1564
    %2037 = vmatpush1.bf16.msra.mxu0 %v1563
    %2038 = vmatprep.subr.bf16.mxu0 %v1568
    %2039 = vmatpush1.bf16.msra.mxu0 %v1567
    %2040 = vmatprep.subr.bf16.mxu0 %v1572
    %2041 = vmatpush1.bf16.msra.mxu0 %v1571
    %2042 = vmatprep.subr.bf16.mxu0 %v1576
    %2043 = vmatpush1.bf16.msra.mxu0 %v1575
    %2044 = vmatprep.subr.bf16.mxu0 %v1580
    %2045 = vmatpush1.bf16.msra.mxu0 %v1579
    %2046 = vmatprep.subr.bf16.mxu0 %v1584
    %2047 = vmatpush1.bf16.msra.mxu0 %v1583
    %2048 = vmatprep.subr.bf16.mxu0 %v1588
    %2049 = vmatpush1.bf16.msra.mxu0 %v1587
    %2050 = vmatprep.subr.bf16.mxu0 %v1592
    %2051 = vmatpush1.bf16.msra.mxu0 %v1591
    %2052 = vmatprep.mubr.bf16.mxu0 %v416
    %2053 = vmatmul.mubr.bf16.gmra.mrb[0].mxu0 %v415
    %v2054 = vpop.f32.mrb[0].mxu0
    %v2055 = vadd.f32 %v2014, %v2054
    %v2056 = vpop.f32.mrb[0].mxu0
    %v2057 = vadd.f32 %v2016, %v2056
    %v2058 = vpop.f32.mrb[0].mxu0
    %v2059 = vpop.f32.mrb[0].mxu0
    %2060 = vdwg.mxu0
    %2061 = vmatprep.subr.bf16.mxu0 %v1596
    %2062 = vmatpush1.bf16.msra.mxu0 %v1595
    %2063 = vmatprep.subr.bf16.mxu0 %v1600
    %2064 = vmatpush1.bf16.msra.mxu0 %v1599
    %2065 = vmatprep.subr.bf16.mxu0 %v1604
    %2066 = vmatpush1.bf16.msra.mxu0 %v1603
    %2067 = vmatprep.subr.bf16.mxu0 %v1608
    %2068 = vmatpush1.bf16.msra.mxu0 %v1607
    %2069 = vmatprep.subr.bf16.mxu0 %v1612
    %2070 = vmatpush1.bf16.msra.mxu0 %v1611
    %2071 = vmatprep.subr.bf16.mxu0 %v1616
    %2072 = vmatpush1.bf16.msra.mxu0 %v1615
    %2073 = vmatprep.subr.bf16.mxu0 %v1620
    %2074 = vmatpush1.bf16.msra.mxu0 %v1619
    %2075 = vmatprep.subr.bf16.mxu0 %v1624
    %2076 = vmatpush1.bf16.msra.mxu0 %v1623
    %2077 = vmatprep.subr.bf16.mxu0 %v1628
    %2078 = vmatpush1.bf16.msra.mxu0 %v1627
    %2079 = vmatprep.subr.bf16.mxu0 %v1632
    %2080 = vmatpush1.bf16.msra.mxu0 %v1631
    %2081 = vmatprep.subr.bf16.mxu0 %v1636
    %2082 = vmatpush1.bf16.msra.mxu0 %v1635
    %2083 = vmatprep.subr.bf16.mxu0 %v1640
    %2084 = vmatpush1.bf16.msra.mxu0 %v1639
    %2085 = vmatprep.subr.bf16.mxu0 %v1644
    %2086 = vmatpush1.bf16.msra.mxu0 %v1643
    %2087 = vmatprep.subr.bf16.mxu0 %v1648
    %2088 = vmatpush1.bf16.msra.mxu0 %v1647
    %2089 = vmatprep.subr.bf16.mxu0 %v1652
    %2090 = vmatpush1.bf16.msra.mxu0 %v1651
    %2091 = vmatprep.subr.bf16.mxu0 %v1656
    %2092 = vmatpush1.bf16.msra.mxu0 %v1655
    %2093 = vmatprep.mubr.bf16.mxu0 %v418
    %2094 = vmatmul.mubr.bf16.gmra.mrb[0].mxu0 %v417
    %v2095 = vpop.f32.mrb[0].mxu0
    %v2096 = vadd.f32 %v2055, %v2095
    %v2097 = vpop.f32.mrb[0].mxu0
    %v2098 = vadd.f32 %v2057, %v2097
    %v2099 = vpop.f32.mrb[0].mxu0
    %v2100 = vpop.f32.mrb[0].mxu0
    %2101 = vdwg.mxu0
    %2102 = vmatprep.subr.bf16.mxu0 %v1660
    %2103 = vmatpush1.bf16.msra.mxu0 %v1659
    %2104 = vmatprep.subr.bf16.mxu0 %v1664
    %2105 = vmatpush1.bf16.msra.mxu0 %v1663
    %2106 = vmatprep.subr.bf16.mxu0 %v1668
    %2107 = vmatpush1.bf16.msra.mxu0 %v1667
    %2108 = vmatprep.subr.bf16.mxu0 %v1672
    %2109 = vmatpush1.bf16.msra.mxu0 %v1671
    %2110 = vmatprep.subr.bf16.mxu0 %v1676
    %2111 = vmatpush1.bf16.msra.mxu0 %v1675
    %2112 = vmatprep.subr.bf16.mxu0 %v1680
    %2113 = vmatpush1.bf16.msra.mxu0 %v1679
    %2114 = vmatprep.subr.bf16.mxu0 %v1684
    %2115 = vmatpush1.bf16.msra.mxu0 %v1683
    %2116 = vmatprep.subr.bf16.mxu0 %v1688
    %2117 = vmatpush1.bf16.msra.mxu0 %v1687
    %2118 = vmatprep.subr.bf16.mxu0 %v1692
    %2119 = vmatpush1.bf16.msra.mxu0 %v1691
    %2120 = vmatprep.subr.bf16.mxu0 %v1696
    %2121 = vmatpush1.bf16.msra.mxu0 %v1695
    %2122 = vmatprep.subr.bf16.mxu0 %v1700
    %2123 = vmatpush1.bf16.msra.mxu0 %v1699
    %2124 = vmatprep.subr.bf16.mxu0 %v1704
    %2125 = vmatpush1.bf16.msra.mxu0 %v1703
    %2126 = vmatprep.subr.bf16.mxu0 %v1708
    %2127 = vmatpush1.bf16.msra.mxu0 %v1707
    %2128 = vmatprep.subr.bf16.mxu0 %v1712
    %2129 = vmatpush1.bf16.msra.mxu0 %v1711
    %2130 = vmatprep.subr.bf16.mxu0 %v1716
    %2131 = vmatpush1.bf16.msra.mxu0 %v1715
    %2132 = vmatprep.subr.bf16.mxu0 %v1720
    %2133 = vmatpush1.bf16.msra.mxu0 %v1719
    %2134 = vmatprep.mubr.bf16.mxu0 %v420
    %2135 = vmatmul.mubr.bf16.gmra.mrb[0].mxu0 %v419
    %v2136 = vpop.f32.mrb[0].mxu0
    %v2137 = vadd.f32 %v2096, %v2136
    %v2138 = vpop.f32.mrb[0].mxu0
    %v2139 = vadd.f32 %v2098, %v2138
    %v2140 = vpop.f32.mrb[0].mxu0
    %v2141 = vpop.f32.mrb[0].mxu0
    %2142 = vdwg.mxu0
    %2143 = vmatprep.subr.bf16.mxu0 %v1470
    %2144 = vmatpush1.bf16.msra.mxu0 %v1469
    %2145 = vmatprep.subr.bf16.mxu0 %v1474
    %2146 = vmatpush1.bf16.msra.mxu0 %v1473
    %2147 = vmatprep.subr.bf16.mxu0 %v1478
    %2148 = vmatpush1.bf16.msra.mxu0 %v1477
    %2149 = vmatprep.subr.bf16.mxu0 %v1482
    %2150 = vmatpush1.bf16.msra.mxu0 %v1481
    %2151 = vmatprep.subr.bf16.mxu0 %v1486
    %2152 = vmatpush1.bf16.msra.mxu0 %v1485
    %2153 = vmatprep.subr.bf16.mxu0 %v1490
    %2154 = vmatpush1.bf16.msra.mxu0 %v1489
    %2155 = vmatprep.subr.bf16.mxu0 %v1494
    %2156 = vmatpush1.bf16.msra.mxu0 %v1493
    %2157 = vmatprep.subr.bf16.mxu0 %v1498
    %2158 = vmatpush1.bf16.msra.mxu0 %v1497
    %2159 = vmatprep.subr.bf16.mxu0 %v1502
    %2160 = vmatpush1.bf16.msra.mxu0 %v1501
    %2161 = vmatprep.subr.bf16.mxu0 %v1506
    %2162 = vmatpush1.bf16.msra.mxu0 %v1505
    %2163 = vmatprep.subr.bf16.mxu0 %v1510
    %2164 = vmatpush1.bf16.msra.mxu0 %v1509
    %2165 = vmatprep.subr.bf16.mxu0 %v1514
    %2166 = vmatpush1.bf16.msra.mxu0 %v1513
    %2167 = vmatprep.subr.bf16.mxu0 %v1518
    %2168 = vmatpush1.bf16.msra.mxu0 %v1517
    %2169 = vmatprep.subr.bf16.mxu0 %v1522
    %2170 = vmatpush1.bf16.msra.mxu0 %v1521
    %2171 = vmatprep.subr.bf16.mxu0 %v1526
    %2172 = vmatpush1.bf16.msra.mxu0 %v1525
    %2173 = vmatprep.subr.bf16.mxu0 %v1530
    %2174 = vmatpush1.bf16.msra.mxu0 %v1529
    %2175 = vmatprep.mubr.bf16.mxu0 %v414
    %2176 = vmatmul.mubr.bf16.gmra.mrb[0].mxu0 %v413
    %v2177 = vpop.f32.mrb[0].mxu0
    %v2178 = vadd.f32 %v690, %v2177
    %v2179 = vpop.f32.mrb[0].mxu0
    %v2180 = vadd.f32 %v694, %v2179
    %v2181 = vpop.f32.mrb[0].mxu0
    %v2182 = vpop.f32.mrb[0].mxu0
    %2183 = vdwg.mxu0
    %2184 = vmatprep.subr.bf16.mxu0 %v1534
    %2185 = vmatpush1.bf16.msra.mxu0 %v1533
    %2186 = vmatprep.subr.bf16.mxu0 %v1538
    %2187 = vmatpush1.bf16.msra.mxu0 %v1537
    %2188 = vmatprep.subr.bf16.mxu0 %v1542
    %2189 = vmatpush1.bf16.msra.mxu0 %v1541
    %2190 = vmatprep.subr.bf16.mxu0 %v1546
    %2191 = vmatpush1.bf16.msra.mxu0 %v1545
    %2192 = vmatprep.subr.bf16.mxu0 %v1550
    %2193 = vmatpush1.bf16.msra.mxu0 %v1549
    %2194 = vmatprep.subr.bf16.mxu0 %v1554
    %2195 = vmatpush1.bf16.msra.mxu0 %v1553
    %2196 = vmatprep.subr.bf16.mxu0 %v1558
    %2197 = vmatpush1.bf16.msra.mxu0 %v1557
    %2198 = vmatprep.subr.bf16.mxu0 %v1562
    %2199 = vmatpush1.bf16.msra.mxu0 %v1561
    %2200 = vmatprep.subr.bf16.mxu0 %v1566
    %2201 = vmatpush1.bf16.msra.mxu0 %v1565
    %2202 = vmatprep.subr.bf16.mxu0 %v1570
    %2203 = vmatpush1.bf16.msra.mxu0 %v1569
    %2204 = vmatprep.subr.bf16.mxu0 %v1574
    %2205 = vmatpush1.bf16.msra.mxu0 %v1573
    %2206 = vmatprep.subr.bf16.mxu0 %v1578
    %2207 = vmatpush1.bf16.msra.mxu0 %v1577
    %2208 = vmatprep.subr.bf16.mxu0 %v1582
    %2209 = vmatpush1.bf16.msra.mxu0 %v1581
    %2210 = vmatprep.subr.bf16.mxu0 %v1586
    %2211 = vmatpush1.bf16.msra.mxu0 %v1585
    %2212 = vmatprep.subr.bf16.mxu0 %v1590
    %2213 = vmatpush1.bf16.msra.mxu0 %v1589
    %2214 = vmatprep.subr.bf16.mxu0 %v1594
    %2215 = vmatpush1.bf16.msra.mxu0 %v1593
    %2216 = vmatprep.mubr.bf16.mxu0 %v416
    %2217 = vmatmul.mubr.bf16.gmra.mrb[0].mxu0 %v415
    %v2218 = vpop.f32.mrb[0].mxu0
    %v2219 = vadd.f32 %v2178, %v2218
    %v2220 = vpop.f32.mrb[0].mxu0
    %v2221 = vadd.f32 %v2180, %v2220
    %v2222 = vpop.f32.mrb[0].mxu0
    %v2223 = vpop.f32.mrb[0].mxu0
    %2224 = vdwg.mxu0
    %2225 = vmatprep.subr.bf16.mxu0 %v1598
    %2226 = vmatpush1.bf16.msra.mxu0 %v1597
    %2227 = vmatprep.subr.bf16.mxu0 %v1602
    %2228 = vmatpush1.bf16.msra.mxu0 %v1601
    %2229 = vmatprep.subr.bf16.mxu0 %v1606
    %2230 = vmatpush1.bf16.msra.mxu0 %v1605
    %2231 = vmatprep.subr.bf16.mxu0 %v1610
    %2232 = vmatpush1.bf16.msra.mxu0 %v1609
    %2233 = vmatprep.subr.bf16.mxu0 %v1614
    %2234 = vmatpush1.bf16.msra.mxu0 %v1613
    %2235 = vmatprep.subr.bf16.mxu0 %v1618
    %2236 = vmatpush1.bf16.msra.mxu0 %v1617
    %2237 = vmatprep.subr.bf16.mxu0 %v1622
    %2238 = vmatpush1.bf16.msra.mxu0 %v1621
    %2239 = vmatprep.subr.bf16.mxu0 %v1626
    %2240 = vmatpush1.bf16.msra.mxu0 %v1625
    %2241 = vmatprep.subr.bf16.mxu0 %v1630
    %2242 = vmatpush1.bf16.msra.mxu0 %v1629
    %2243 = vmatprep.subr.bf16.mxu0 %v1634
    %2244 = vmatpush1.bf16.msra.mxu0 %v1633
    %2245 = vmatprep.subr.bf16.mxu0 %v1638
    %2246 = vmatpush1.bf16.msra.mxu0 %v1637
    %2247 = vmatprep.subr.bf16.mxu0 %v1642
    %2248 = vmatpush1.bf16.msra.mxu0 %v1641
    %2249 = vmatprep.subr.bf16.mxu0 %v1646
    %2250 = vmatpush1.bf16.msra.mxu0 %v1645
    %2251 = vmatprep.subr.bf16.mxu0 %v1650
    %2252 = vmatpush1.bf16.msra.mxu0 %v1649
    %2253 = vmatprep.subr.bf16.mxu0 %v1654
    %2254 = vmatpush1.bf16.msra.mxu0 %v1653
    %2255 = vmatprep.subr.bf16.mxu0 %v1658
    %2256 = vmatpush1.bf16.msra.mxu0 %v1657
    %2257 = vmatprep.mubr.bf16.mxu0 %v418
    %2258 = vmatmul.mubr.bf16.gmra.mrb[0].mxu0 %v417
    %v2259 = vpop.f32.mrb[0].mxu0
    %v2260 = vadd.f32 %v2219, %v2259
    %v2261 = vpop.f32.mrb[0].mxu0
    %v2262 = vadd.f32 %v2221, %v2261
    %v2263 = vpop.f32.mrb[0].mxu0
    %v2264 = vpop.f32.mrb[0].mxu0
    %2265 = vdwg.mxu0
    %2266 = vmatprep.subr.bf16.mxu0 %v1662
    %2267 = vmatpush1.bf16.msra.mxu0 %v1661
    %2268 = vmatprep.subr.bf16.mxu0 %v1666
    %2269 = vmatpush1.bf16.msra.mxu0 %v1665
    %2270 = vmatprep.subr.bf16.mxu0 %v1670
    %2271 = vmatpush1.bf16.msra.mxu0 %v1669
    %2272 = vmatprep.subr.bf16.mxu0 %v1674
    %2273 = vmatpush1.bf16.msra.mxu0 %v1673
    %2274 = vmatprep.subr.bf16.mxu0 %v1678
    %2275 = vmatpush1.bf16.msra.mxu0 %v1677
    %2276 = vmatprep.subr.bf16.mxu0 %v1682
    %2277 = vmatpush1.bf16.msra.mxu0 %v1681
    %2278 = vmatprep.subr.bf16.mxu0 %v1686
    %2279 = vmatpush1.bf16.msra.mxu0 %v1685
    %2280 = vmatprep.subr.bf16.mxu0 %v1690
    %2281 = vmatpush1.bf16.msra.mxu0 %v1689
    %2282 = vmatprep.subr.bf16.mxu0 %v1694
    %2283 = vmatpush1.bf16.msra.mxu0 %v1693
    %2284 = vmatprep.subr.bf16.mxu0 %v1698
    %2285 = vmatpush1.bf16.msra.mxu0 %v1697
    %2286 = vmatprep.subr.bf16.mxu0 %v1702
    %2287 = vmatpush1.bf16.msra.mxu0 %v1701
    %2288 = vmatprep.subr.bf16.mxu0 %v1706
    %2289 = vmatpush1.bf16.msra.mxu0 %v1705
    %2290 = vmatprep.subr.bf16.mxu0 %v1710
    %2291 = vmatpush1.bf16.msra.mxu0 %v1709
    %2292 = vmatprep.subr.bf16.mxu0 %v1714
    %2293 = vmatpush1.bf16.msra.mxu0 %v1713
    %2294 = vmatprep.subr.bf16.mxu0 %v1718
    %2295 = vmatpush1.bf16.msra.mxu0 %v1717
    %2296 = vmatprep.subr.bf16.mxu0 %v1722
    %2297 = vmatpush1.bf16.msra.mxu0 %v1721
    %2298 = vmatprep.mubr.bf16.mxu0 %v420
    %2299 = vmatmul.mubr.bf16.gmra.mrb[0].mxu0 %v419
    %v2300 = vpop.f32.mrb[0].mxu0
    %v2301 = vadd.f32 %v2260, %v2300
    %v2302 = vpop.f32.mrb[0].mxu0
    %v2303 = vadd.f32 %v2262, %v2302
    %v2304 = vpop.f32.mrb[0].mxu0
    %v2305 = vpop.f32.mrb[0].mxu0
    %2306 = vdwg.mxu0
    %v2307 = vmax.f32 %v2137, 0.0
    %v2308 = vmax.f32 %v2139, 0.0
    %v2309 = vmax.f32 %v2301, 0.0
    %v2310 = vmax.f32 %v2303, 0.0
    %v2311 = vpack.c.bf16 %v2307, %v2307
    %v2312 = vpack.c.bf16 %v2308, %v2308
    %v2313 = vpack.c.bf16 %v2309, %v2309
    %v2314 = vpack.c.bf16 %v2310, %v2310
    %v2315 = vld [vmem:[#allocation9] sm:$0xff]
    %v2316 = vld [vmem:[#allocation9 + $0x8] sm:$0xff]
    %v2317 = vld [vmem:[#allocation9 + $0x10] sm:$0xff]
    %v2318 = vld [vmem:[#allocation9 + $0x18] sm:$0xff]
    %v2319 = vld [vmem:[#allocation9 + $0x20] sm:$0xff]
    %v2320 = vld [vmem:[#allocation9 + $0x28] sm:$0xff]
    %v2321 = vld [vmem:[#allocation9 + $0x30] sm:$0xff]
    %v2322 = vld [vmem:[#allocation9 + $0x38] sm:$0xff]
    %v2323 = vld [vmem:[#allocation9 + $0x40] sm:$0xff]
    %v2324 = vld [vmem:[#allocation9 + $0x48] sm:$0xff]
    %v2325 = vld [vmem:[#allocation9 + $0x50] sm:$0xff]
    %v2326 = vld [vmem:[#allocation9 + $0x58] sm:$0xff]
    %v2327 = vld [vmem:[#allocation9 + $0x60] sm:$0xff]
    %v2328 = vld [vmem:[#allocation9 + $0x68] sm:$0xff]
    %v2329 = vld [vmem:[#allocation9 + $0x70] sm:$0xff]
    %v2330 = vld [vmem:[#allocation9 + $0x78] sm:$0xff]
    %v2331 = vld [vmem:[#allocation9 + $0x80] sm:$0xff]
    %v2332 = vld [vmem:[#allocation9 + $0x88] sm:$0xff]
    %v2333 = vld [vmem:[#allocation9 + $0x90] sm:$0xff]
    %v2334 = vld [vmem:[#allocation9 + $0x98] sm:$0xff]
    %v2335 = vld [vmem:[#allocation9 + $0xa0] sm:$0xff]
    %v2336 = vld [vmem:[#allocation9 + $0xa8] sm:$0xff]
    %v2337 = vld [vmem:[#allocation9 + $0xb0] sm:$0xff]
    %v2338 = vld [vmem:[#allocation9 + $0xb8] sm:$0xff]
    %v2339 = vld [vmem:[#allocation9 + $0xc0] sm:$0xff]
    %v2340 = vld [vmem:[#allocation9 + $0xc8] sm:$0xff]
    %v2341 = vld [vmem:[#allocation9 + $0xd0] sm:$0xff]
    %v2342 = vld [vmem:[#allocation9 + $0xd8] sm:$0xff]
    %v2343 = vld [vmem:[#allocation9 + $0xe0] sm:$0xff]
    %v2344 = vld [vmem:[#allocation9 + $0xe8] sm:$0xff]
    %v2345 = vld [vmem:[#allocation9 + $0xf0] sm:$0xff]
    %v2346 = vld [vmem:[#allocation9 + $0xf8] sm:$0xff]
    %v2347 = vld [vmem:[#allocation9 + $0x100] sm:$0xff]
    %v2348 = vld [vmem:[#allocation9 + $0x108] sm:$0xff]
    %v2349 = vld [vmem:[#allocation9 + $0x110] sm:$0xff]
    %v2350 = vld [vmem:[#allocation9 + $0x118] sm:$0xff]
    %v2351 = vld [vmem:[#allocation9 + $0x120] sm:$0xff]
    %v2352 = vld [vmem:[#allocation9 + $0x128] sm:$0xff]
    %v2353 = vld [vmem:[#allocation9 + $0x130] sm:$0xff]
    %v2354 = vld [vmem:[#allocation9 + $0x138] sm:$0xff]
    %v2355 = vld [vmem:[#allocation9 + $0x140] sm:$0xff]
    %v2356 = vld [vmem:[#allocation9 + $0x148] sm:$0xff]
    %v2357 = vld [vmem:[#allocation9 + $0x150] sm:$0xff]
    %v2358 = vld [vmem:[#allocation9 + $0x158] sm:$0xff]
    %v2359 = vld [vmem:[#allocation9 + $0x160] sm:$0xff]
    %v2360 = vld [vmem:[#allocation9 + $0x168] sm:$0xff]
    %v2361 = vld [vmem:[#allocation9 + $0x170] sm:$0xff]
    %v2362 = vld [vmem:[#allocation9 + $0x178] sm:$0xff]
    %v2363 = vld [vmem:[#allocation9 + $0x180] sm:$0xff]
    %v2364 = vld [vmem:[#allocation9 + $0x188] sm:$0xff]
    %v2365 = vld [vmem:[#allocation9 + $0x190] sm:$0xff]
    %v2366 = vld [vmem:[#allocation9 + $0x198] sm:$0xff]
    %v2367 = vld [vmem:[#allocation9 + $0x1a0] sm:$0xff]
    %v2368 = vld [vmem:[#allocation9 + $0x1a8] sm:$0xff]
    %v2369 = vld [vmem:[#allocation9 + $0x1b0] sm:$0xff]
    %v2370 = vld [vmem:[#allocation9 + $0x1b8] sm:$0xff]
    %v2371 = vld [vmem:[#allocation9 + $0x1c0] sm:$0xff]
    %v2372 = vld [vmem:[#allocation9 + $0x1c8] sm:$0xff]
    %v2373 = vld [vmem:[#allocation9 + $0x1d0] sm:$0xff]
    %v2374 = vld [vmem:[#allocation9 + $0x1d8] sm:$0xff]
    %v2375 = vld [vmem:[#allocation9 + $0x1e0] sm:$0xff]
    %v2376 = vld [vmem:[#allocation9 + $0x1e8] sm:$0xff]
    %v2377 = vld [vmem:[#allocation9 + $0x1f0] sm:$0xff]
    %v2378 = vld [vmem:[#allocation9 + $0x1f8] sm:$0xff]
    %v2379 = vld [vmem:[%s6] sm:$0x3]
    %v2381 = vlaneseq
    %v2382 = vshrl.u32 %v2381, 7
    %v2383 = vsub.s32 0, %v2382
    %v2384 = vrot.slane %v2379, %v2383
    %v2385 = vlaneseq
    %v2386 = vshrl.u32 %v2385, 7
    %v2387 = vsub.s32 1, %v2386
    %v2388 = vrot.slane %v2379, %v2387
    %v2455 = vunpack.c.l.b16 %v2315
    %v2456 = vunpack.c.h.b16 %v2315
    %v2457 = vunpack.c.l.b16 %v2316
    %v2458 = vunpack.c.h.b16 %v2316
    %v2459 = vunpack.c.l.b16 %v2317
    %v2460 = vunpack.c.h.b16 %v2317
    %v2461 = vunpack.c.l.b16 %v2318
    %v2462 = vunpack.c.h.b16 %v2318
    %v2463 = vunpack.c.l.b16 %v2319
    %v2464 = vunpack.c.h.b16 %v2319
    %v2465 = vunpack.c.l.b16 %v2320
    %v2466 = vunpack.c.h.b16 %v2320
    %v2467 = vunpack.c.l.b16 %v2321
    %v2468 = vunpack.c.h.b16 %v2321
    %v2469 = vunpack.c.l.b16 %v2322
    %v2470 = vunpack.c.h.b16 %v2322
    %v2471 = vunpack.c.l.b16 %v2323
    %v2472 = vunpack.c.h.b16 %v2323
    %v2473 = vunpack.c.l.b16 %v2324
    %v2474 = vunpack.c.h.b16 %v2324
    %v2475 = vunpack.c.l.b16 %v2325
    %v2476 = vunpack.c.h.b16 %v2325
    %v2477 = vunpack.c.l.b16 %v2326
    %v2478 = vunpack.c.h.b16 %v2326
    %v2479 = vunpack.c.l.b16 %v2327
    %v2480 = vunpack.c.h.b16 %v2327
    %v2481 = vunpack.c.l.b16 %v2328
    %v2482 = vunpack.c.h.b16 %v2328
    %v2483 = vunpack.c.l.b16 %v2329
    %v2484 = vunpack.c.h.b16 %v2329
    %v2485 = vunpack.c.l.b16 %v2330
    %v2486 = vunpack.c.h.b16 %v2330
    %v2487 = vunpack.c.l.b16 %v2331
    %v2488 = vunpack.c.h.b16 %v2331
    %v2489 = vunpack.c.l.b16 %v2332
    %v2490 = vunpack.c.h.b16 %v2332
    %v2491 = vunpack.c.l.b16 %v2333
    %v2492 = vunpack.c.h.b16 %v2333
    %v2493 = vunpack.c.l.b16 %v2334
    %v2494 = vunpack.c.h.b16 %v2334
    %v2495 = vunpack.c.l.b16 %v2335
    %v2496 = vunpack.c.h.b16 %v2335
    %v2497 = vunpack.c.l.b16 %v2336
    %v2498 = vunpack.c.h.b16 %v2336
    %v2499 = vunpack.c.l.b16 %v2337
    %v2500 = vunpack.c.h.b16 %v2337
    %v2501 = vunpack.c.l.b16 %v2338
    %v2502 = vunpack.c.h.b16 %v2338
    %v2503 = vunpack.c.l.b16 %v2339
    %v2504 = vunpack.c.h.b16 %v2339
    %v2505 = vunpack.c.l.b16 %v2340
    %v2506 = vunpack.c.h.b16 %v2340
    %v2507 = vunpack.c.l.b16 %v2341
    %v2508 = vunpack.c.h.b16 %v2341
    %v2509 = vunpack.c.l.b16 %v2342
    %v2510 = vunpack.c.h.b16 %v2342
    %v2511 = vunpack.c.l.b16 %v2343
    %v2512 = vunpack.c.h.b16 %v2343
    %v2513 = vunpack.c.l.b16 %v2344
    %v2514 = vunpack.c.h.b16 %v2344
    %v2515 = vunpack.c.l.b16 %v2345
    %v2516 = vunpack.c.h.b16 %v2345
    %v2517 = vunpack.c.l.b16 %v2346
    %v2518 = vunpack.c.h.b16 %v2346
    %v2519 = vunpack.c.l.b16 %v2347
    %v2520 = vunpack.c.h.b16 %v2347
    %v2521 = vunpack.c.l.b16 %v2348
    %v2522 = vunpack.c.h.b16 %v2348
    %v2523 = vunpack.c.l.b16 %v2349
    %v2524 = vunpack.c.h.b16 %v2349
    %v2525 = vunpack.c.l.b16 %v2350
    %v2526 = vunpack.c.h.b16 %v2350
    %v2527 = vunpack.c.l.b16 %v2351
    %v2528 = vunpack.c.h.b16 %v2351
    %v2529 = vunpack.c.l.b16 %v2352
    %v2530 = vunpack.c.h.b16 %v2352
    %v2531 = vunpack.c.l.b16 %v2353
    %v2532 = vunpack.c.h.b16 %v2353
    %v2533 = vunpack.c.l.b16 %v2354
    %v2534 = vunpack.c.h.b16 %v2354
    %v2535 = vunpack.c.l.b16 %v2355
    %v2536 = vunpack.c.h.b16 %v2355
    %v2537 = vunpack.c.l.b16 %v2356
    %v2538 = vunpack.c.h.b16 %v2356
    %v2539 = vunpack.c.l.b16 %v2357
    %v2540 = vunpack.c.h.b16 %v2357
    %v2541 = vunpack.c.l.b16 %v2358
    %v2542 = vunpack.c.h.b16 %v2358
    %v2543 = vunpack.c.l.b16 %v2359
    %v2544 = vunpack.c.h.b16 %v2359
    %v2545 = vunpack.c.l.b16 %v2360
    %v2546 = vunpack.c.h.b16 %v2360
    %v2547 = vunpack.c.l.b16 %v2361
    %v2548 = vunpack.c.h.b16 %v2361
    %v2549 = vunpack.c.l.b16 %v2362
    %v2550 = vunpack.c.h.b16 %v2362
    %v2551 = vunpack.c.l.b16 %v2363
    %v2552 = vunpack.c.h.b16 %v2363
    %v2553 = vunpack.c.l.b16 %v2364
    %v2554 = vunpack.c.h.b16 %v2364
    %v2555 = vunpack.c.l.b16 %v2365
    %v2556 = vunpack.c.h.b16 %v2365
    %v2557 = vunpack.c.l.b16 %v2366
    %v2558 = vunpack.c.h.b16 %v2366
    %v2559 = vunpack.c.l.b16 %v2367
    %v2560 = vunpack.c.h.b16 %v2367
    %v2561 = vunpack.c.l.b16 %v2368
    %v2562 = vunpack.c.h.b16 %v2368
    %v2563 = vunpack.c.l.b16 %v2369
    %v2564 = vunpack.c.h.b16 %v2369
    %v2565 = vunpack.c.l.b16 %v2370
    %v2566 = vunpack.c.h.b16 %v2370
    %v2567 = vunpack.c.l.b16 %v2371
    %v2568 = vunpack.c.h.b16 %v2371
    %v2569 = vunpack.c.l.b16 %v2372
    %v2570 = vunpack.c.h.b16 %v2372
    %v2571 = vunpack.c.l.b16 %v2373
    %v2572 = vunpack.c.h.b16 %v2373
    %v2573 = vunpack.c.l.b16 %v2374
    %v2574 = vunpack.c.h.b16 %v2374
    %v2575 = vunpack.c.l.b16 %v2375
    %v2576 = vunpack.c.h.b16 %v2375
    %v2577 = vunpack.c.l.b16 %v2376
    %v2578 = vunpack.c.h.b16 %v2376
    %v2579 = vunpack.c.l.b16 %v2377
    %v2580 = vunpack.c.h.b16 %v2377
    %v2581 = vunpack.c.l.b16 %v2378
    %v2582 = vunpack.c.h.b16 %v2378
    %v2583 = vpack.c.b16 %v2457, %v2455
    %v2584 = vpack.c.b16 %v2458, %v2456
    %v2585 = vpack.c.b16 %v2461, %v2459
    %v2586 = vpack.c.b16 %v2462, %v2460
    %v2587 = vpack.c.b16 %v2465, %v2463
    %v2588 = vpack.c.b16 %v2466, %v2464
    %v2589 = vpack.c.b16 %v2469, %v2467
    %v2590 = vpack.c.b16 %v2470, %v2468
    %v2591 = vpack.c.b16 %v2473, %v2471
    %v2592 = vpack.c.b16 %v2474, %v2472
    %v2593 = vpack.c.b16 %v2477, %v2475
    %v2594 = vpack.c.b16 %v2478, %v2476
    %v2595 = vpack.c.b16 %v2481, %v2479
    %v2596 = vpack.c.b16 %v2482, %v2480
    %v2597 = vpack.c.b16 %v2485, %v2483
    %v2598 = vpack.c.b16 %v2486, %v2484
    %v2599 = vpack.c.b16 %v2489, %v2487
    %v2600 = vpack.c.b16 %v2490, %v2488
    %v2601 = vpack.c.b16 %v2493, %v2491
    %v2602 = vpack.c.b16 %v2494, %v2492
    %v2603 = vpack.c.b16 %v2497, %v2495
    %v2604 = vpack.c.b16 %v2498, %v2496
    %v2605 = vpack.c.b16 %v2501, %v2499
    %v2606 = vpack.c.b16 %v2502, %v2500
    %v2607 = vpack.c.b16 %v2505, %v2503
    %v2608 = vpack.c.b16 %v2506, %v2504
    %v2609 = vpack.c.b16 %v2509, %v2507
    %v2610 = vpack.c.b16 %v2510, %v2508
    %v2611 = vpack.c.b16 %v2513, %v2511
    %v2612 = vpack.c.b16 %v2514, %v2512
    %v2613 = vpack.c.b16 %v2517, %v2515
    %v2614 = vpack.c.b16 %v2518, %v2516
    %v2615 = vpack.c.b16 %v2521, %v2519
    %v2616 = vpack.c.b16 %v2522, %v2520
    %v2617 = vpack.c.b16 %v2525, %v2523
    %v2618 = vpack.c.b16 %v2526, %v2524
    %v2619 = vpack.c.b16 %v2529, %v2527
    %v2620 = vpack.c.b16 %v2530, %v2528
    %v2621 = vpack.c.b16 %v2533, %v2531
    %v2622 = vpack.c.b16 %v2534, %v2532
    %v2623 = vpack.c.b16 %v2537, %v2535
    %v2624 = vpack.c.b16 %v2538, %v2536
    %v2625 = vpack.c.b16 %v2541, %v2539
    %v2626 = vpack.c.b16 %v2542, %v2540
    %v2627 = vpack.c.b16 %v2545, %v2543
    %v2628 = vpack.c.b16 %v2546, %v2544
    %v2629 = vpack.c.b16 %v2549, %v2547
    %v2630 = vpack.c.b16 %v2550, %v2548
    %v2631 = vpack.c.b16 %v2553, %v2551
    %v2632 = vpack.c.b16 %v2554, %v2552
    %v2633 = vpack.c.b16 %v2557, %v2555
    %v2634 = vpack.c.b16 %v2558, %v2556
    %v2635 = vpack.c.b16 %v2561, %v2559
    %v2636 = vpack.c.b16 %v2562, %v2560
    %v2637 = vpack.c.b16 %v2565, %v2563
    %v2638 = vpack.c.b16 %v2566, %v2564
    %v2639 = vpack.c.b16 %v2569, %v2567
    %v2640 = vpack.c.b16 %v2570, %v2568
    %v2641 = vpack.c.b16 %v2573, %v2571
    %v2642 = vpack.c.b16 %v2574, %v2572
    %v2643 = vpack.c.b16 %v2577, %v2575
    %v2644 = vpack.c.b16 %v2578, %v2576
    %v2645 = vpack.c.b16 %v2581, %v2579
    %v2646 = vpack.c.b16 %v2582, %v2580
    %2711 = vmatprep.subr.bf16.mxu0 %v2584
    %2712 = vmatpush1.bf16.msra.mxu0 %v2583
    %2713 = vmatprep.subr.bf16.mxu0 %v2586
    %2714 = vmatpush1.bf16.msra.mxu0 %v2585
    %2715 = vmatprep.subr.bf16.mxu0 %v2588
    %2716 = vmatpush1.bf16.msra.mxu0 %v2587
    %2717 = vmatprep.subr.bf16.mxu0 %v2590
    %2718 = vmatpush1.bf16.msra.mxu0 %v2589
    %2719 = vmatprep.subr.bf16.mxu0 %v2592
    %2720 = vmatpush1.bf16.msra.mxu0 %v2591
    %2721 = vmatprep.subr.bf16.mxu0 %v2594
    %2722 = vmatpush1.bf16.msra.mxu0 %v2593
    %2723 = vmatprep.subr.bf16.mxu0 %v2596
    %2724 = vmatpush1.bf16.msra.mxu0 %v2595
    %2725 = vmatprep.subr.bf16.mxu0 %v2598
    %2726 = vmatpush1.bf16.msra.mxu0 %v2597
    %2727 = vmatprep.subr.bf16.mxu0 %v2600
    %2728 = vmatpush1.bf16.msra.mxu0 %v2599
    %2729 = vmatprep.subr.bf16.mxu0 %v2602
    %2730 = vmatpush1.bf16.msra.mxu0 %v2601
    %2731 = vmatprep.subr.bf16.mxu0 %v2604
    %2732 = vmatpush1.bf16.msra.mxu0 %v2603
    %2733 = vmatprep.subr.bf16.mxu0 %v2606
    %2734 = vmatpush1.bf16.msra.mxu0 %v2605
    %2735 = vmatprep.subr.bf16.mxu0 %v2608
    %2736 = vmatpush1.bf16.msra.mxu0 %v2607
    %2737 = vmatprep.subr.bf16.mxu0 %v2610
    %2738 = vmatpush1.bf16.msra.mxu0 %v2609
    %2739 = vmatprep.subr.bf16.mxu0 %v2612
    %2740 = vmatpush1.bf16.msra.mxu0 %v2611
    %2741 = vmatprep.subr.bf16.mxu0 %v2614
    %2742 = vmatpush1.bf16.msra.mxu0 %v2613
    %2743 = vmatprep.mubr.bf16.mxu0 %v2312
    %2744 = vmatmul.mubr.bf16.gmra.mrb[0].mxu0 %v2311
    %v2745 = vpop.f32.mrb[0].mxu0
    %v2746 = vadd.f32 %v2384, %v2745
    %v2747 = vpop.f32.mrb[0].mxu0
    %v2748 = vadd.f32 %v2388, %v2747
    %v2749 = vpop.f32.mrb[0].mxu0
    %v2750 = vpop.f32.mrb[0].mxu0
    %2751 = vdwg.mxu0
    %2752 = vmatprep.subr.bf16.mxu0 %v2616
    %2753 = vmatpush1.bf16.msra.mxu0 %v2615
    %2754 = vmatprep.subr.bf16.mxu0 %v2618
    %2755 = vmatpush1.bf16.msra.mxu0 %v2617
    %2756 = vmatprep.subr.bf16.mxu0 %v2620
    %2757 = vmatpush1.bf16.msra.mxu0 %v2619
    %2758 = vmatprep.subr.bf16.mxu0 %v2622
    %2759 = vmatpush1.bf16.msra.mxu0 %v2621
    %2760 = vmatprep.subr.bf16.mxu0 %v2624
    %2761 = vmatpush1.bf16.msra.mxu0 %v2623
    %2762 = vmatprep.subr.bf16.mxu0 %v2626
    %2763 = vmatpush1.bf16.msra.mxu0 %v2625
    %2764 = vmatprep.subr.bf16.mxu0 %v2628
    %2765 = vmatpush1.bf16.msra.mxu0 %v2627
    %2766 = vmatprep.subr.bf16.mxu0 %v2630
    %2767 = vmatpush1.bf16.msra.mxu0 %v2629
    %2768 = vmatprep.subr.bf16.mxu0 %v2632
    %2769 = vmatpush1.bf16.msra.mxu0 %v2631
    %2770 = vmatprep.subr.bf16.mxu0 %v2634
    %2771 = vmatpush1.bf16.msra.mxu0 %v2633
    %2772 = vmatprep.subr.bf16.mxu0 %v2636
    %2773 = vmatpush1.bf16.msra.mxu0 %v2635
    %2774 = vmatprep.subr.bf16.mxu0 %v2638
    %2775 = vmatpush1.bf16.msra.mxu0 %v2637
    %2776 = vmatprep.subr.bf16.mxu0 %v2640
    %2777 = vmatpush1.bf16.msra.mxu0 %v2639
    %2778 = vmatprep.subr.bf16.mxu0 %v2642
    %2779 = vmatpush1.bf16.msra.mxu0 %v2641
    %2780 = vmatprep.subr.bf16.mxu0 %v2644
    %2781 = vmatpush1.bf16.msra.mxu0 %v2643
    %2782 = vmatprep.subr.bf16.mxu0 %v2646
    %2783 = vmatpush1.bf16.msra.mxu0 %v2645
    %2784 = vmatprep.mubr.bf16.mxu0 %v2314
    %2785 = vmatmul.mubr.bf16.gmra.mrb[0].mxu0 %v2313
    %v2786 = vpop.f32.mrb[0].mxu0
    %v2787 = vadd.f32 %v2746, %v2786
    %v2788 = vpop.f32.mrb[0].mxu0
    %v2789 = vadd.f32 %v2748, %v2788
    %v2790 = vpop.f32.mrb[0].mxu0
    %v2791 = vpop.f32.mrb[0].mxu0
    %2792 = vdwg.mxu0
    %v2793 = vmax.f32 %v2787, 0.0
    %v2794 = vmax.f32 %v2789, 0.0
    %v2795 = vpack.c.bf16 %v2793, %v2793
    %v2796 = vpack.c.bf16 %v2794, %v2794
    %v2797 = vld [vmem:[#allocation11] sm:$0xf]
    %v2798 = vld [vmem:[#allocation11 + $0x4] sm:$0xf]
    %v2799 = vld [vmem:[#allocation11 + $0x8] sm:$0xf]
    %v2800 = vld [vmem:[#allocation11 + $0xc] sm:$0xf]
    %v2801 = vld [vmem:[#allocation11 + $0x10] sm:$0xf]
    %v2802 = vld [vmem:[#allocation11 + $0x14] sm:$0xf]
    %v2803 = vld [vmem:[#allocation11 + $0x18] sm:$0xf]
    %v2804 = vld [vmem:[#allocation11 + $0x1c] sm:$0xf]
    %v2805 = vld [vmem:[#allocation11 + $0x20] sm:$0xf]
    %v2806 = vld [vmem:[#allocation11 + $0x24] sm:$0xf]
    %v2807 = vld [vmem:[#allocation11 + $0x28] sm:$0xf]
    %v2808 = vld [vmem:[#allocation11 + $0x2c] sm:$0xf]
    %v2809 = vld [vmem:[#allocation11 + $0x30] sm:$0xf]
    %v2810 = vld [vmem:[#allocation11 + $0x34] sm:$0xf]
    %v2811 = vld [vmem:[#allocation11 + $0x38] sm:$0xf]
    %v2812 = vld [vmem:[#allocation11 + $0x3c] sm:$0xf]
    %v2813 = vld [vmem:[#allocation11 + $0x40] sm:$0xf]
    %v2814 = vld [vmem:[#allocation11 + $0x44] sm:$0xf]
    %v2815 = vld [vmem:[#allocation11 + $0x48] sm:$0xf]
    %v2816 = vld [vmem:[#allocation11 + $0x4c] sm:$0xf]
    %v2817 = vld [vmem:[#allocation11 + $0x50] sm:$0xf]
    %v2818 = vld [vmem:[#allocation11 + $0x54] sm:$0xf]
    %v2819 = vld [vmem:[#allocation11 + $0x58] sm:$0xf]
    %v2820 = vld [vmem:[#allocation11 + $0x5c] sm:$0xf]
    %v2821 = vld [vmem:[#allocation11 + $0x60] sm:$0xf]
    %v2822 = vld [vmem:[#allocation11 + $0x64] sm:$0xf]
    %v2823 = vld [vmem:[#allocation11 + $0x68] sm:$0xf]
    %v2824 = vld [vmem:[#allocation11 + $0x6c] sm:$0xf]
    %v2825 = vld [vmem:[#allocation11 + $0x70] sm:$0xf]
    %v2826 = vld [vmem:[#allocation11 + $0x74] sm:$0xf]
    %v2827 = vld [vmem:[#allocation11 + $0x78] sm:$0xf]
    %v2828 = vld [vmem:[#allocation11 + $0x7c] sm:$0xf]
    %v2829 = vld [vmem:[%s8] sm:$0x1]
    %v2831 = vlaneseq
    %v2832 = vshrl.u32 %v2831, 7
    %v2833 = vsub.s32 0, %v2832
    %v2834 = vrot.slane %v2829, %v2833
    %v2868 = vunpack.c.l.b16 %v2797
    %v2869 = vunpack.c.l.b16 %v2798
    %v2870 = vunpack.c.l.b16 %v2799
    %v2871 = vunpack.c.l.b16 %v2800
    %v2872 = vunpack.c.l.b16 %v2801
    %v2873 = vunpack.c.l.b16 %v2802
    %v2874 = vunpack.c.l.b16 %v2803
    %v2875 = vunpack.c.l.b16 %v2804
    %v2876 = vunpack.c.l.b16 %v2805
    %v2877 = vunpack.c.l.b16 %v2806
    %v2878 = vunpack.c.l.b16 %v2807
    %v2879 = vunpack.c.l.b16 %v2808
    %v2880 = vunpack.c.l.b16 %v2809
    %v2881 = vunpack.c.l.b16 %v2810
    %v2882 = vunpack.c.l.b16 %v2811
    %v2883 = vunpack.c.l.b16 %v2812
    %v2884 = vunpack.c.l.b16 %v2813
    %v2885 = vunpack.c.l.b16 %v2814
    %v2886 = vunpack.c.l.b16 %v2815
    %v2887 = vunpack.c.l.b16 %v2816
    %v2888 = vunpack.c.l.b16 %v2817
    %v2889 = vunpack.c.l.b16 %v2818
    %v2890 = vunpack.c.l.b16 %v2819
    %v2891 = vunpack.c.l.b16 %v2820
    %v2892 = vunpack.c.l.b16 %v2821
    %v2893 = vunpack.c.l.b16 %v2822
    %v2894 = vunpack.c.l.b16 %v2823
    %v2895 = vunpack.c.l.b16 %v2824
    %v2896 = vunpack.c.l.b16 %v2825
    %v2897 = vunpack.c.l.b16 %v2826
    %v2898 = vunpack.c.l.b16 %v2827
    %v2899 = vunpack.c.l.b16 %v2828
    %v2900 = vpack.c.b16 %v2869, %v2868
    %v2901 = vpack.c.b16 %v2871, %v2870
    %v2902 = vpack.c.b16 %v2873, %v2872
    %v2903 = vpack.c.b16 %v2875, %v2874
    %v2904 = vpack.c.b16 %v2877, %v2876
    %v2905 = vpack.c.b16 %v2879, %v2878
    %v2906 = vpack.c.b16 %v2881, %v2880
    %v2907 = vpack.c.b16 %v2883, %v2882
    %v2908 = vpack.c.b16 %v2885, %v2884
    %v2909 = vpack.c.b16 %v2887, %v2886
    %v2910 = vpack.c.b16 %v2889, %v2888
    %v2911 = vpack.c.b16 %v2891, %v2890
    %v2912 = vpack.c.b16 %v2893, %v2892
    %v2913 = vpack.c.b16 %v2895, %v2894
    %v2914 = vpack.c.b16 %v2897, %v2896
    %v2915 = vpack.c.b16 %v2899, %v2898
    %2932 = vmatprep.subr.bf16.mxu0 0
    %2933 = vmatpush1.bf16.msra.mxu0 %v2900
    %2934 = vmatprep.subr.bf16.mxu0 0
    %2935 = vmatpush1.bf16.msra.mxu0 %v2901
    %2936 = vmatprep.subr.bf16.mxu0 0
    %2937 = vmatpush1.bf16.msra.mxu0 %v2902
    %2938 = vmatprep.subr.bf16.mxu0 0
    %2939 = vmatpush1.bf16.msra.mxu0 %v2903
    %2940 = vmatprep.subr.bf16.mxu0 0
    %2941 = vmatpush1.bf16.msra.mxu0 %v2904
    %2942 = vmatprep.subr.bf16.mxu0 0
    %2943 = vmatpush1.bf16.msra.mxu0 %v2905
    %2944 = vmatprep.subr.bf16.mxu0 0
    %2945 = vmatpush1.bf16.msra.mxu0 %v2906
    %2946 = vmatprep.subr.bf16.mxu0 0
    %2947 = vmatpush1.bf16.msra.mxu0 %v2907
    %2948 = vmatprep.subr.bf16.mxu0 0
    %2949 = vmatpush1.bf16.msra.mxu0 %v2908
    %2950 = vmatprep.subr.bf16.mxu0 0
    %2951 = vmatpush1.bf16.msra.mxu0 %v2909
    %2952 = vmatprep.subr.bf16.mxu0 0
    %2953 = vmatpush1.bf16.msra.mxu0 %v2910
    %2954 = vmatprep.subr.bf16.mxu0 0
    %2955 = vmatpush1.bf16.msra.mxu0 %v2911
    %2956 = vmatprep.subr.bf16.mxu0 0
    %2957 = vmatpush1.bf16.msra.mxu0 %v2912
    %2958 = vmatprep.subr.bf16.mxu0 0
    %2959 = vmatpush1.bf16.msra.mxu0 %v2913
    %2960 = vmatprep.subr.bf16.mxu0 0
    %2961 = vmatpush1.bf16.msra.mxu0 %v2914
    %2962 = vmatprep.subr.bf16.mxu0 0
    %2963 = vmatpush1.bf16.msra.mxu0 %v2915
    %2964 = vmatprep.mubr.bf16.mxu0 %v2796
    %2965 = vmatmul.mubr.bf16.gmra.mrb[0].mxu0 %v2795
    %v2966 = vpop.f32.mrb[0].mxu0
    %v2967 = vadd.f32 %v2834, %v2966
    %v2968 = vpop.f32.mrb[0].mxu0
    %v2969 = vpop.f32.mrb[0].mxu0
    %v2970 = vpop.f32.mrb[0].mxu0
    %2971 = vdwg.mxu0
    %v2972 = vmax.f32 %v2967, 0.0
    %v2973 = vpack.c.bf16 %v2972, %v2972
    %v2974 = vld [vmem:[#allocation12] sm:$0xf]
    %v2975 = vld [vmem:[#allocation12 + $0x4] sm:$0xf]
    %v2976 = vld [vmem:[#allocation12 + $0x8] sm:$0xf]
    %v2977 = vld [vmem:[#allocation12 + $0xc] sm:$0xf]
    %v2978 = vld [vmem:[#allocation12 + $0x10] sm:$0xf]
    %v2979 = vld [vmem:[#allocation12 + $0x14] sm:$0xf]
    %v2980 = vld [vmem:[#allocation12 + $0x18] sm:$0xf]
    %v2981 = vld [vmem:[#allocation12 + $0x1c] sm:$0xf]
    %v2982 = vld [vmem:[#allocation12 + $0x20] sm:$0xf]
    %v2983 = vld [vmem:[#allocation12 + $0x24] sm:$0xf]
    %v2984 = vld [vmem:[#allocation12 + $0x28] sm:$0xf]
    %v2985 = vld [vmem:[#allocation12 + $0x2c] sm:$0xf]
    %v2986 = vld [vmem:[#allocation12 + $0x30] sm:$0xf]
    %v2987 = vld [vmem:[#allocation12 + $0x34] sm:$0xf]
    %v2988 = vld [vmem:[#allocation12 + $0x38] sm:$0xf]
    %v2989 = vld [vmem:[#allocation12 + $0x3c] sm:$0xf]
    %v2990 = vld [vmem:[%s10] sm:$0x1]
    %v2992 = vlaneseq
    %v2993 = vshrl.u32 %v2992, 7
    %v2994 = vsub.s32 0, %v2993
    %v2995 = vrot.slane %v2990, %v2994
    %v3013 = vunpack.c.l.b16 %v2974
    %v3014 = vunpack.c.l.b16 %v2975
    %v3015 = vunpack.c.l.b16 %v2976
    %v3016 = vunpack.c.l.b16 %v2977
    %v3017 = vunpack.c.l.b16 %v2978
    %v3018 = vunpack.c.l.b16 %v2979
    %v3019 = vunpack.c.l.b16 %v2980
    %v3020 = vunpack.c.l.b16 %v2981
    %v3021 = vunpack.c.l.b16 %v2982
    %v3022 = vunpack.c.l.b16 %v2983
    %v3023 = vunpack.c.l.b16 %v2984
    %v3024 = vunpack.c.l.b16 %v2985
    %v3025 = vunpack.c.l.b16 %v2986
    %v3026 = vunpack.c.l.b16 %v2987
    %v3027 = vunpack.c.l.b16 %v2988
    %v3028 = vunpack.c.l.b16 %v2989
    %v3029 = vpack.c.b16 %v3014, %v3013
    %v3030 = vpack.c.b16 %v3016, %v3015
    %v3031 = vpack.c.b16 %v3018, %v3017
    %v3032 = vpack.c.b16 %v3020, %v3019
    %v3033 = vpack.c.b16 %v3022, %v3021
    %v3034 = vpack.c.b16 %v3024, %v3023
    %v3035 = vpack.c.b16 %v3026, %v3025
    %v3036 = vpack.c.b16 %v3028, %v3027
    %3045 = vmatprep.subr.bf16.mxu0 0
    %3046 = vmatpush1.bf16.msra.mxu0 %v3029
    %3047 = vmatprep.subr.bf16.mxu0 0
    %3048 = vmatpush1.bf16.msra.mxu0 %v3030
    %3049 = vmatprep.subr.bf16.mxu0 0
    %3050 = vmatpush1.bf16.msra.mxu0 %v3031
    %3051 = vmatprep.subr.bf16.mxu0 0
    %3052 = vmatpush1.bf16.msra.mxu0 %v3032
    %3053 = vmatprep.subr.bf16.mxu0 0
    %3054 = vmatpush1.bf16.msra.mxu0 %v3033
    %3055 = vmatprep.subr.bf16.mxu0 0
    %3056 = vmatpush1.bf16.msra.mxu0 %v3034
    %3057 = vmatprep.subr.bf16.mxu0 0
    %3058 = vmatpush1.bf16.msra.mxu0 %v3035
    %3059 = vmatprep.subr.bf16.mxu0 0
    %3060 = vmatpush1.bf16.msra.mxu0 %v3036
    %3061 = vmatprep.subr.bf16.mxu0 0
    %3062 = vmatpush1.bf16.msra.mxu0 0
    %3063 = vmatprep.subr.bf16.mxu0 0
    %3064 = vmatpush1.bf16.msra.mxu0 0
    %3065 = vmatprep.subr.bf16.mxu0 0
    %3066 = vmatpush1.bf16.msra.mxu0 0
    %3067 = vmatprep.subr.bf16.mxu0 0
    %3068 = vmatpush1.bf16.msra.mxu0 0
    %3069 = vmatprep.subr.bf16.mxu0 0
    %3070 = vmatpush1.bf16.msra.mxu0 0
    %3071 = vmatprep.subr.bf16.mxu0 0
    %3072 = vmatpush1.bf16.msra.mxu0 0
    %3073 = vmatprep.subr.bf16.mxu0 0
    %3074 = vmatpush1.bf16.msra.mxu0 0
    %3075 = vmatprep.subr.bf16.mxu0 0
    %3076 = vmatpush1.bf16.msra.mxu0 0
    %3077 = vmatprep.mubr.bf16.mxu0 0
    %3078 = vmatmul.mubr.bf16.gmra.mrb[0].mxu0 %v2973
    %v3079 = vpop.f32.mrb[0].mxu0
    %v3080 = vadd.f32 %v2995, %v3079
    %v3081 = vpop.f32.mrb[0].mxu0
    %v3082 = vpop.f32.mrb[0].mxu0
    %v3083 = vpop.f32.mrb[0].mxu0
    %3084 = vdwg.mxu0
    %v3085 = vmax.f32 %v3080, 0.0
    %v3086 = vpack.c.bf16 %v3085, %v3085
    %v3087 = vld [vmem:[%s11] sm:$0x1]
    %v3088 = vld [vmem:[#allocation2] sm:$0x1]
    %3090 = vset.pattern.permute.xlu0 0
    %3091 = vperm.xlu0 %3090, %v3088
    %v3092 = vpop.permute.xlu0 %3091
    %v3094 = vlaneseq
    %v3095 = vshrl.u32 %v3094, 7
    %v3096 = vsub.s32 0, %v3095
    %v3097 = vrot.slane %v3092, %v3096
    %3098 = vmatprep.subr.bf16.mxu0 0
    %3099 = vmatpush1.bf16.xpose.msra.mxu0 %v3086
    %3100 = vmatprep.subr.bf16.mxu0 0
    %3101 = vmatpush1.bf16.xpose.msra.mxu0 0
    %3102 = vmatprep.subr.bf16.mxu0 0
    %3103 = vmatpush1.bf16.xpose.msra.mxu0 0
    %3104 = vmatprep.subr.bf16.mxu0 0
    %3105 = vmatpush1.bf16.xpose.msra.mxu0 0
    %3106 = vmatprep.subr.bf16.mxu0 0
    %3107 = vmatpush1.bf16.xpose.msra.mxu0 0
    %3108 = vmatprep.subr.bf16.mxu0 0
    %3109 = vmatpush1.bf16.xpose.msra.mxu0 0
    %3110 = vmatprep.subr.bf16.mxu0 0
    %3111 = vmatpush1.bf16.xpose.msra.mxu0 0
    %3112 = vmatprep.subr.bf16.mxu0 0
    %3113 = vmatpush1.bf16.xpose.msra.mxu0 0
    %3114 = vmatprep.subr.bf16.mxu0 0
    %3115 = vmatpush1.bf16.xpose.msra.mxu0 0
    %3116 = vmatprep.subr.bf16.mxu0 0
    %3117 = vmatpush1.bf16.xpose.msra.mxu0 0
    %3118 = vmatprep.subr.bf16.mxu0 0
    %3119 = vmatpush1.bf16.xpose.msra.mxu0 0
    %3120 = vmatprep.subr.bf16.mxu0 0
    %3121 = vmatpush1.bf16.xpose.msra.mxu0 0
    %3122 = vmatprep.subr.bf16.mxu0 0
    %3123 = vmatpush1.bf16.xpose.msra.mxu0 0
    %3124 = vmatprep.subr.bf16.mxu0 0
    %3125 = vmatpush1.bf16.xpose.msra.mxu0 0
    %3126 = vmatprep.subr.bf16.mxu0 0
    %3127 = vmatpush1.bf16.xpose.msra.mxu0 0
    %3128 = vmatprep.subr.bf16.mxu0 0
    %3129 = vmatpush1.bf16.xpose.msra.mxu0 0
    %3130 = vmatprep.mubr.bf16.mxu0 0
    %3131 = vmatmul.mubr.bf16.gmra.mrb[0].mxu0 %v3087
    %v3132 = vpop.f32.mrb[0].mxu0
    %v3133 = vadd.f32 %v3097, %v3132
    %v3134 = vpop.f32.mrb[0].mxu0
    %v3135 = vpop.f32.mrb[0].mxu0
    %v3136 = vpop.f32.mrb[0].mxu0
    %3137 = vdwg.mxu0
    %v3138 = vmul.f32 %v3133, 0.5
    %v3139 = vtanh.pop %v3138
    %v3140 = vadd.f32 %v3139, 1.0
    %v3141 = vmul.f32 %v3140, 0.5
    %vm3142 = vcmask 57344
    %3143 = vst.msk [vmem:[#allocation14] sm:$0x1] %vm3142, %v3141
    // Predicated region
    $region78: #{tpu_custom_call.1} parent=1 // pred_check
      _
    $region79: #{tpu_custom_call.1} parent=1 // pred_check_branch
      %3145 = sbr.rel (0) target = $region81
    $region80: #{tpu_custom_call.1} parent=1 // pred_region
      %s3147 = ssub.s32 16, 16
      %3148 = vsyncadd [#allocation5], %s3147
      %s3150 = sshll.u32 [#allocation14], 4
      %s3151 = int_to_ptr.vmem [resolvable:$true] %s3150
      %3153 = dma.vmem_to_hbm [thread:$0]  %s3151, 16, %s13, [#allocation5]
    $region81: #{tpu_custom_call.1} parent=1 // pred_fallthru
      _
    // Predicated region
    $region82: #{tpu_custom_call.1} parent=1 // pred_check
      _
    $region83: #{tpu_custom_call.1} parent=1 // pred_check_branch
      %3155 = sbr.rel (0) target = $region85
    $region84: #{tpu_custom_call.1} parent=1 // pred_region
      %3156 = dma.done [#allocation5], 16
    $region85: #{tpu_custom_call.1} parent=1 // pred_fallthru
      _
    %3157 = vsyncpa [#allocation4], 1
    %3158 = vsyncpa [#allocation7], 1
    %3159 = vsyncpa [#allocation10], 1
    %3160 = vsyncpa [#allocation13], 1
    %3161 = vsyncpa [#allocation5], 1

</llo_original>
